<compile_context>
chip_gen: v7x
topology: tpu7x:2x2x1
jax: 0.10.0
libtpu: 0.0.40
codegen_flags: <defaults>
</compile_context>

<pallas_src>
import functools

import jax
import jax.numpy as jnp
from jax.experimental import pallas as pl
from jax.experimental.pallas import tpu as pltpu


def _round_up(x, m):
    return ((x + m - 1) // m) * m


def _choose_k_tiling(in_dim):
    """Return (tk, in_dim_pad) with in_dim_pad % tk == 0."""
    for tk in (2048, 1024, 512, 256, 128):
        if in_dim % tk == 0:
            return tk, in_dim
    in_dim_pad = _round_up(in_dim, 128)
    for tk in (2048, 1024, 512, 256, 128):
        if in_dim_pad % tk == 0:
            return tk, in_dim_pad
    return 128, _round_up(in_dim, 128)


def _simclr_kernel(n_valid, n_row,
                   x1_ref, x2_ref, wv_ref, bv_ref,
                   w1_ref, b1_ref, g1_ref, be1_ref,
                   w2_ref, b2_ref, g2_ref, be2_ref,
                   w3_ref, b3_ref,
                   out_ref, acc_ref):
    """grid = (k_tile,).

    Both branches accumulate into one (2*n_row, vw) f32 scratch using the SAME
    resident wv K-tile.  On the last K step the 3-layer SSL MLP with
    per-branch train-mode BatchNorm (eps=1e-5) + ReLU runs on the merged slab
    and writes the lane-dense padded output block.
    """
    k = pl.program_id(0)
    nk = pl.num_programs(0)

    @pl.when(k == 0)
    def _():
        acc_ref[...] = jnp.zeros_like(acc_ref)

    # ---- stand-in vision encoder, K-tiled; wv tile shared by both branches --
    x1 = x1_ref[...].astype(jnp.bfloat16)        # f32 HBM read, VPU cast (free)
    x2 = x2_ref[...].astype(jnp.bfloat16)
    wv = wv_ref[...]
    acc_ref[0:n_valid, :] += jnp.dot(x1, wv, preferred_element_type=jnp.float32)
    acc_ref[n_row:n_row + n_valid, :] += jnp.dot(
        x2, wv, preferred_element_type=jnp.float32)

    @pl.when(k == nk - 1)
    def _():
        eps = jnp.float32(1e-5)
        inv_n = jnp.float32(1.0 / n_valid)
        rows = jax.lax.broadcasted_iota(jnp.int32, (2 * n_row, 1), 0)
        m0 = (rows < n_valid).astype(jnp.float32)                    # branch 0
        m1 = ((rows >= n_row) & (rows < n_row + n_valid)).astype(jnp.float32)

        def bn_relu(z, g, be):
            # Per-branch masked batch stats (train mode, biased var), centered
            # variance for numerical safety; padded rows get scale=shift=0.
            def stats(m):
                mu = jnp.sum(z * m, axis=0, keepdims=True) * inv_n
                d = (z - mu) * m
                var = jnp.sum(d * d, axis=0, keepdims=True) * inv_n
                scale = g * jax.lax.rsqrt(var + eps)        # rsqrt -> EUP slot
                shift = be - mu * scale
                return scale, shift

            s0, sh0 = stats(m0)
            s1, sh1 = stats(m1)
            scale = m0 * s0 + m1 * s1
            shift = m0 * sh0 + m1 * sh1
            return jnp.maximum(z * scale + shift, 0.0)

        h = acc_ref[...] + bv_ref[...]                               # f32

        z = jnp.dot(h.astype(jnp.bfloat16), w1_ref[...],
                    preferred_element_type=jnp.float32) + b1_ref[...]
        z = bn_relu(z, g1_ref[...], be1_ref[...])

        z = jnp.dot(z.astype(jnp.bfloat16), w2_ref[...],
                    preferred_element_type=jnp.float32) + b2_ref[...]
        z = bn_relu(z, g2_ref[...], be2_ref[...])

        out = jnp.dot(z.astype(jnp.bfloat16), w3_ref[...],
                      preferred_element_type=jnp.float32) + b3_ref[...]
        out_ref[...] = out.astype(out_ref.dtype)


@functools.partial(jax.jit, static_argnames=("emb_dim",))
def simclr_forward(aug1, aug2, packed, *, emb_dim):
    """Matches SIMCLR.forward: returns {'aug1_embed', 'aug2_embed'}.

    aug1/aug2: NCHW float32 images.  `packed` comes from pack_params (padded,
    bf16 weights).  Both branches run in one pallas_call and share all weight
    HBM traffic.
    """
    (wv, bv, w1, b1, g1, be1, w2, b2, g2, be2, w3, b3) = packed

    n = aug1.shape[0]
    x1 = aug1.reshape(n, -1).astype(jnp.float32)     # metadata-only reshape
    x2 = aug2.reshape(n, -1).astype(jnp.float32)
    in_dim = x1.shape[1]

    in_dim_pad, vw_pad = wv.shape
    mlp_pad = w1.shape[1]
    emb_pad = w3.shape[1]
    tk, _ = _choose_k_tiling(in_dim_pad)
    nk = in_dim_pad // tk
    n_row = _round_up(n, 8)                          # per-branch row region

    if in_dim_pad != in_dim:
        # TODO(synk): one extra copy pass, only for non-128-divisible in_dim.
        x1 = jnp.pad(x1, ((0, 0), (0, in_dim_pad - in_dim)))
        x2 = jnp.pad(x2, ((0, 0), (0, in_dim_pad - in_dim)))

    const = lambda k: (0, 0)
    resident = pl.Buffered(1)        # constant blocks: fetch once, 1 buffer

    in_specs = [
        pl.BlockSpec((n, tk), lambda k: (0, k)),                   # x1 K-tile
        pl.BlockSpec((n, tk), lambda k: (0, k)),                   # x2 K-tile
        pl.BlockSpec((tk, vw_pad), lambda k: (k, 0)),              # wv K-tile
        pl.BlockSpec((1, vw_pad), const, pipeline_mode=resident),  # bv
        pl.BlockSpec((vw_pad, mlp_pad), const, pipeline_mode=resident),  # w1
        pl.BlockSpec((1, mlp_pad), const, pipeline_mode=resident),       # b1
        pl.BlockSpec((1, mlp_pad), const, pipeline_mode=resident),       # g1
        pl.BlockSpec((1, mlp_pad), const, pipeline_mode=resident),       # be1
        pl.BlockSpec((mlp_pad, mlp_pad), const, pipeline_mode=resident), # w2
        pl.BlockSpec((1, mlp_pad), const, pipeline_mode=resident),       # b2
        pl.BlockSpec((1, mlp_pad), const, pipeline_mode=resident),       # g2
        pl.BlockSpec((1, mlp_pad), const, pipeline_mode=resident),       # be2
        pl.BlockSpec((mlp_pad, emb_pad), const, pipeline_mode=resident), # w3
        pl.BlockSpec((1, emb_pad), const, pipeline_mode=resident),       # b3
    ]
    out_spec = pl.BlockSpec((2 * n_row, emb_pad), lambda k: (0, 0))

    # ---- VMEM budget, re-derived from actual resident buffers ---------------
    bytes_x = 2 * 2 * n * tk * 4                    # two branches, 2 buffers
    bytes_wv = 2 * tk * vw_pad * 2                  # double-buffered bf16 tile
    bytes_w = (vw_pad * mlp_pad + mlp_pad * mlp_pad + mlp_pad * emb_pad) * 2
    bytes_bn = (vw_pad + 6 * mlp_pad + emb_pad) * 4
    bytes_out = 2 * 2 * n_row * emb_pad * 4
    bytes_acc = 2 * n_row * vw_pad * 4
    need = bytes_x + bytes_wv + bytes_w + bytes_bn + bytes_out + bytes_acc
    # v7x has 64 MiB VMEM per TC, v5e/v6e 128 MiB; leave headroom for Mosaic
    # internal scratch and clamp to a safe scoped limit.
    vmem_limit = max(int(need * 5 // 4) + (2 << 20), 32 << 20)
    vmem_limit = min(vmem_limit, 112 << 20)

    # ---- cost estimate (wv counted ONCE, f32 input read included) -----------
    flops = 2 * (2 * n * in_dim_pad * vw_pad
                 + 2 * n * (vw_pad * mlp_pad + mlp_pad * mlp_pad
                            + mlp_pad * emb_pad))
    bytes_accessed = (2 * n * in_dim_pad * 4
                      + in_dim_pad * vw_pad * 2
                      + (vw_pad * mlp_pad + mlp_pad * mlp_pad
                         + mlp_pad * emb_pad) * 2
                      + (vw_pad + 6 * mlp_pad + emb_pad) * 4
                      + 2 * n_row * emb_pad * 4)
    transcendentals = 2 * 2 * mlp_pad               # rsqrt per branch, per BN

    out = pl.pallas_call(
        functools.partial(_simclr_kernel, n, n_row),
        out_shape=jax.ShapeDtypeStruct((2 * n_row, emb_pad), jnp.float32),
        grid_spec=pltpu.PrefetchScalarGridSpec(
            num_scalar_prefetch=0,
            grid=(nk,),
            in_specs=in_specs,
            out_specs=out_spec,
            scratch_shapes=[pltpu.VMEM((2 * n_row, vw_pad), jnp.float32)],
        ),
        compiler_params=pltpu.CompilerParams(
            dimension_semantics=("arbitrary",),
            vmem_limit_bytes=vmem_limit,
        ),
        cost_estimate=pl.CostEstimate(
            flops=flops,
            transcendentals=transcendentals,
            bytes_accessed=bytes_accessed,
        ),
    )(x1, x2, wv, bv, w1, b1, g1, be1, w2, b2, g2, be2, w3, b3)

    return {
        "aug1_embed": out[:n, :emb_dim],
        "aug2_embed": out[n_row:n_row + n, :emb_dim],
    }


def init_params(key, in_dim, vision_width, mlp_dim, emb_dim):
    """Deterministic synthetic parameters (f32, logical shapes).

    Weights are stored as (in, out), i.e. transposed vs. torch.nn.Linear.
    Biases / BN affine params are stored as (1, dim).
    """
    ks = jax.random.split(key, 8)
    scale = 0.02

    wv = scale * jax.random.normal(ks[0], (in_dim, vision_width), jnp.float32)
    bv = scale * jax.random.normal(ks[1], (1, vision_width), jnp.float32)

    w1 = scale * jax.random.normal(ks[2], (vision_width, mlp_dim), jnp.float32)
    b1 = scale * jax.random.normal(ks[3], (1, mlp_dim), jnp.float32)
    g1 = jnp.ones((1, mlp_dim), jnp.float32)
    be1 = jnp.zeros((1, mlp_dim), jnp.float32)

    w2 = scale * jax.random.normal(ks[4], (mlp_dim, mlp_dim), jnp.float32)
    b2 = scale * jax.random.normal(ks[5], (1, mlp_dim), jnp.float32)
    g2 = jnp.ones((1, mlp_dim), jnp.float32)
    be2 = jnp.zeros((1, mlp_dim), jnp.float32)

    w3 = scale * jax.random.normal(ks[6], (mlp_dim, emb_dim), jnp.float32)
    b3 = scale * jax.random.normal(ks[7], (1, emb_dim), jnp.float32)

    return (wv, bv, w1, b1, g1, be1, w2, b2, g2, be2, w3, b3)


def pack_params(params):
    """One-time pad-to-lane-dense (multiples of 128) + bf16 cast of weights.

    Called OUTSIDE the jitted forward so no per-step cast/pad HBM traffic.
    Zero padding keeps the math exact (padded columns/rows contribute 0 and
    padded BN gammas are 0, so padded activations are zeroed by BN).
    """
    (wv, bv, w1, b1, g1, be1, w2, b2, g2, be2, w3, b3) = params
    in_dim, vw = wv.shape
    mlp = w1.shape[1]
    emb = w3.shape[1]
    _, in_dim_pad = _choose_k_tiling(in_dim)
    vw_pad = _round_up(vw, 128)
    mlp_pad = _round_up(mlp, 128)
    emb_pad = _round_up(emb, 128)

    def pad2(a, r, c):
        return jnp.pad(a, ((0, r - a.shape[0]), (0, c - a.shape[1])))

    return (
        pad2(wv, in_dim_pad, vw_pad).astype(jnp.bfloat16),
        pad2(bv, 1, vw_pad),
        pad2(w1, vw_pad, mlp_pad).astype(jnp.bfloat16),
        pad2(b1, 1, mlp_pad),
        pad2(g1, 1, mlp_pad),
        pad2(be1, 1, mlp_pad),
        pad2(w2, mlp_pad, mlp_pad).astype(jnp.bfloat16),
        pad2(b2, 1, mlp_pad),
        pad2(g2, 1, mlp_pad),
        pad2(be2, 1, mlp_pad),
        pad2(w3, mlp_pad, emb_pad).astype(jnp.bfloat16),
        pad2(b3, 1, emb_pad),
    )


if __name__ == "__main__":
    # Small shapes consistent with the module.
    N, C, H, W = 2, 4, 16, 16          # batch of 2 NCHW images
    vision_width = 32
    ssl_mlp_dim = 64
    ssl_emb_dim = 32
    in_dim = C * H * W                 # 1024

    key = jax.random.PRNGKey(0)
    k_a1, k_a2, k_p = jax.random.split(key, 3)

    aug1 = jax.random.normal(k_a1, (N, C, H, W), jnp.float32)
    aug2 = jax.random.normal(k_a2, (N, C, H, W), jnp.float32)
    params = init_params(k_p, in_dim, vision_width, ssl_mlp_dim, ssl_emb_dim)
    packed = pack_params(params)       # one-time pad + bf16 cast (outside jit)

    out = simclr_forward(aug1, aug2, packed, emb_dim=ssl_emb_dim)
    jax.block_until_ready(out)

    assert out["aug1_embed"].shape == (N, ssl_emb_dim)
    assert out["aug2_embed"].shape == (N, ssl_emb_dim)
    assert jnp.all(jnp.isfinite(out["aug1_embed"]))
    assert jnp.all(jnp.isfinite(out["aug2_embed"]))
    print("KERNEL_OK")
</pallas_src>

<mosaic_0001>
module attributes {stable_mosaic.version = 11 : i64} {
  func.func @_simclr_kernel(%arg0: i32, %arg1: memref<2x1024xf32, #tpu.memory_space<vmem>>, %arg2: memref<2x1024xf32, #tpu.memory_space<vmem>>, %arg3: memref<1024x128xbf16, #tpu.memory_space<vmem>>, %arg4: memref<1x128xf32, #tpu.memory_space<vmem>>, %arg5: memref<128x128xbf16, #tpu.memory_space<vmem>>, %arg6: memref<1x128xf32, #tpu.memory_space<vmem>>, %arg7: memref<1x128xf32, #tpu.memory_space<vmem>>, %arg8: memref<1x128xf32, #tpu.memory_space<vmem>>, %arg9: memref<128x128xbf16, #tpu.memory_space<vmem>>, %arg10: memref<1x128xf32, #tpu.memory_space<vmem>>, %arg11: memref<1x128xf32, #tpu.memory_space<vmem>>, %arg12: memref<1x128xf32, #tpu.memory_space<vmem>>, %arg13: memref<128x128xbf16, #tpu.memory_space<vmem>>, %arg14: memref<1x128xf32, #tpu.memory_space<vmem>>, %arg15: memref<16x128xf32, #tpu.memory_space<vmem>>, %arg16: memref<16x128xf32, #tpu.memory_space<vmem>>) attributes {dimension_semantics = [#tpu.dimension_semantics<arbitrary>], iteration_bounds = array<i64: 1>, scalar_prefetch = 0 : i64, scratch_operands = 1 : i64, tpu.core_type = #tpu.core_type<tc>, window_params = [{transform_indices = @transform_0, window_bounds = array<i64: 2, 1024>}, {transform_indices = @transform_1, window_bounds = array<i64: 2, 1024>}, {transform_indices = @transform_2, window_bounds = array<i64: 1024, 128>}, {pipeline_mode = #tpu.pipeline_mode<synchronous>, transform_indices = @transform_3, window_bounds = array<i64: 1, 128>}, {pipeline_mode = #tpu.pipeline_mode<synchronous>, transform_indices = @transform_4, window_bounds = array<i64: 128, 128>}, {pipeline_mode = #tpu.pipeline_mode<synchronous>, transform_indices = @transform_5, window_bounds = array<i64: 1, 128>}, {pipeline_mode = #tpu.pipeline_mode<synchronous>, transform_indices = @transform_6, window_bounds = array<i64: 1, 128>}, {pipeline_mode = #tpu.pipeline_mode<synchronous>, transform_indices = @transform_7, window_bounds = array<i64: 1, 128>}, {pipeline_mode = #tpu.pipeline_mode<synchronous>, transform_indices = @transform_8, window_bounds = array<i64: 128, 128>}, {pipeline_mode = #tpu.pipeline_mode<synchronous>, transform_indices = @transform_9, window_bounds = array<i64: 1, 128>}, {pipeline_mode = #tpu.pipeline_mode<synchronous>, transform_indices = @transform_10, window_bounds = array<i64: 1, 128>}, {pipeline_mode = #tpu.pipeline_mode<synchronous>, transform_indices = @transform_11, window_bounds = array<i64: 1, 128>}, {pipeline_mode = #tpu.pipeline_mode<synchronous>, transform_indices = @transform_12, window_bounds = array<i64: 128, 128>}, {pipeline_mode = #tpu.pipeline_mode<synchronous>, transform_indices = @transform_13, window_bounds = array<i64: 1, 128>}, {pipeline_mode = #tpu.pipeline_mode<synchronous>, transform_indices = @transform_14, window_bounds = array<i64: 16, 128>}]} {
    %c0_i32 = arith.constant 0 : i32
    %0 = arith.cmpi eq, %arg0, %c0_i32 : i32
    %1 = arith.extui %0 : i1 to i32
    %c0_i32_0 = arith.constant 0 : i32
    %2 = arith.cmpi ne, %1, %c0_i32_0 : i32
    scf.if %2 {
      %cst_16 = arith.constant 0.000000e+00 : f32
      %19 = vector.broadcast %cst_16 : f32 to vector<16x128xf32>
      %c0_17 = arith.constant 0 : index
      %c0_18 = arith.constant 0 : index
      %20 = vector.load %arg16[%c0_17, %c0_18] : memref<16x128xf32, #tpu.memory_space<vmem>>, vector<16x128xf32>
      tpu.vector_store %arg16[%c0_17, %c0_18], %19 {strides = array<i32>} : memref<16x128xf32, #tpu.memory_space<vmem>>, vector<16x128xf32>,
    } else {
    }
    %c0 = arith.constant 0 : index
    %c0_1 = arith.constant 0 : index
    %3 = vector.load %arg1[%c0, %c0_1] : memref<2x1024xf32, #tpu.memory_space<vmem>>, vector<2x1024xf32>
    %4 = arith.truncf %3 : vector<2x1024xf32> to vector<2x1024xbf16>
    %c0_2 = arith.constant 0 : index
    %c0_3 = arith.constant 0 : index
    %5 = vector.load %arg2[%c0_2, %c0_3] : memref<2x1024xf32, #tpu.memory_space<vmem>>, vector<2x1024xf32>
    %6 = arith.truncf %5 : vector<2x1024xf32> to vector<2x1024xbf16>
    %c0_4 = arith.constant 0 : index
    %c0_5 = arith.constant 0 : index
    %7 = vector.load %arg3[%c0_4, %c0_5] : memref<1024x128xbf16, #tpu.memory_space<vmem>>, vector<1024x128xbf16>
    %c0_6 = arith.constant 0 : index
    %c0_7 = arith.constant 0 : index
    %8 = vector.load %arg16[%c0_6, %c0_7] : memref<16x128xf32, #tpu.memory_space<vmem>>, vector<2x128xf32>
    %cst = arith.constant dense<0.000000e+00> : vector<2x128xf32>
    %9 = tpu.matmul %4, %7, %cst {dimension_numbers = #tpu.dot_dimension_numbers<[1], [0], [0], [1], [0, 0, 1, 1], [], []>} : vector<2x1024xbf16>, vector<1024x128xbf16>, vector<2x128xf32> -> vector<2x128xf32>
    %10 = arith.addf %8, %9 : vector<2x128xf32>
    %c0_8 = arith.constant 0 : index
    %c0_9 = arith.constant 0 : index
    %11 = vector.load %arg16[%c0_8, %c0_9] : memref<16x128xf32, #tpu.memory_space<vmem>>, vector<2x128xf32>
    tpu.vector_store %arg16[%c0_8, %c0_9], %10 {strides = array<i32>} : memref<16x128xf32, #tpu.memory_space<vmem>>, vector<2x128xf32>,
    %c8 = arith.constant 8 : index
    %c0_10 = arith.constant 0 : index
    %12 = vector.load %arg16[%c8, %c0_10] : memref<16x128xf32, #tpu.memory_space<vmem>>, vector<2x128xf32>
    %cst_11 = arith.constant dense<0.000000e+00> : vector<2x128xf32>
    %13 = tpu.matmul %6, %7, %cst_11 {dimension_numbers = #tpu.dot_dimension_numbers<[1], [0], [0], [1], [0, 0, 1, 1], [], []>} : vector<2x1024xbf16>, vector<1024x128xbf16>, vector<2x128xf32> -> vector<2x128xf32>
    %14 = arith.addf %12, %13 : vector<2x128xf32>
    %c8_12 = arith.constant 8 : index
    %c0_13 = arith.constant 0 : index
    %15 = vector.load %arg16[%c8_12, %c0_13] : memref<16x128xf32, #tpu.memory_space<vmem>>, vector<2x128xf32>
    tpu.vector_store %arg16[%c8_12, %c0_13], %14 {strides = array<i32>} : memref<16x128xf32, #tpu.memory_space<vmem>>, vector<2x128xf32>,
    %c0_i32_14 = arith.constant 0 : i32
    %16 = arith.cmpi eq, %arg0, %c0_i32_14 : i32
    %17 = arith.extui %16 : i1 to i32
    %c0_i32_15 = arith.constant 0 : i32
    %18 = arith.cmpi ne, %17, %c0_i32_15 : i32
    scf.if %18 {
      %19 = tpu.iota {dimensions = array<i32: 0>} : vector<16x1xi32>
      %c2_i32 = arith.constant 2 : i32
      %20 = vector.broadcast %c2_i32 : i32 to vector<16x1xi32>
      %21 = arith.cmpi slt, %19, %20 : vector<16x1xi32>
      %22 = arith.extui %21 : vector<16x1xi1> to vector<16x1xi32>
      %23 = arith.sitofp %22 : vector<16x1xi32> to vector<16x1xf32>
      %c8_i32 = arith.constant 8 : i32
      %24 = vector.broadcast %c8_i32 : i32 to vector<16x1xi32>
      %25 = arith.cmpi sge, %19, %24 : vector<16x1xi32>
      %c10_i32 = arith.constant 10 : i32
      %26 = vector.broadcast %c10_i32 : i32 to vector<16x1xi32>
      %27 = arith.cmpi slt, %19, %26 : vector<16x1xi32>
      %28 = arith.andi %25, %27 : vector<16x1xi1>
      %29 = arith.extui %28 : vector<16x1xi1> to vector<16x1xi32>
      %30 = arith.sitofp %29 : vector<16x1xi32> to vector<16x1xf32>
      %c0_16 = arith.constant 0 : index
      %c0_17 = arith.constant 0 : index
      %31 = vector.load %arg16[%c0_16, %c0_17] : memref<16x128xf32, #tpu.memory_space<vmem>>, vector<16x128xf32>
      %c0_18 = arith.constant 0 : index
      %c0_19 = arith.constant 0 : index
      %32 = vector.load %arg4[%c0_18, %c0_19] : memref<1x128xf32, #tpu.memory_space<vmem>>, vector<1x128xf32>
      %33 = vector.broadcast %32 : vector<1x128xf32> to vector<16x128xf32>
      %34 = arith.addf %31, %33 : vector<16x128xf32>
      %35 = arith.truncf %34 : vector<16x128xf32> to vector<16x128xbf16>
      %c0_20 = arith.constant 0 : index
      %c0_21 = arith.constant 0 : index
      %36 = vector.load %arg5[%c0_20, %c0_21] : memref<128x128xbf16, #tpu.memory_space<vmem>>, vector<128x128xbf16>
      %cst_22 = arith.constant dense<0.000000e+00> : vector<16x128xf32>
      %37 = tpu.matmul %35, %36, %cst_22 {dimension_numbers = #tpu.dot_dimension_numbers<[1], [0], [0], [1], [0, 0, 1, 1], [], []>} : vector<16x128xbf16>, vector<128x128xbf16>, vector<16x128xf32> -> vector<16x128xf32>
      %c0_23 = arith.constant 0 : index
      %c0_24 = arith.constant 0 : index
      %38 = vector.load %arg6[%c0_23, %c0_24] : memref<1x128xf32, #tpu.memory_space<vmem>>, vector<1x128xf32>
      %39 = vector.broadcast %38 : vector<1x128xf32> to vector<16x128xf32>
      %40 = arith.addf %37, %39 : vector<16x128xf32>
      %c0_25 = arith.constant 0 : index
      %c0_26 = arith.constant 0 : index
      %41 = vector.load %arg7[%c0_25, %c0_26] : memref<1x128xf32, #tpu.memory_space<vmem>>, vector<1x128xf32>
      %c0_27 = arith.constant 0 : index
      %c0_28 = arith.constant 0 : index
      %42 = vector.load %arg8[%c0_27, %c0_28] : memref<1x128xf32, #tpu.memory_space<vmem>>, vector<1x128xf32>
      %43 = vector.broadcast %23 : vector<16x1xf32> to vector<16x128xf32>
      %44 = arith.mulf %40, %43 : vector<16x128xf32>
      %cst_29 = arith.constant dense<0.000000e+00> : vector<128xf32>
      %45 = vector.multi_reduction <add>, %44, %cst_29 [0] : vector<16x128xf32> to vector<128xf32>
      %46 = vector.shape_cast %45 : vector<128xf32> to vector<1x128xf32>
      %cst_30 = arith.constant 5.000000e-01 : f32
      %47 = vector.broadcast %cst_30 : f32 to vector<1x128xf32>
      %48 = arith.mulf %46, %47 : vector<1x128xf32>
      %49 = vector.broadcast %48 : vector<1x128xf32> to vector<16x128xf32>
      %50 = arith.subf %40, %49 : vector<16x128xf32>
      %51 = vector.broadcast %23 : vector<16x1xf32> to vector<16x128xf32>
      %52 = arith.mulf %50, %51 : vector<16x128xf32>
      %53 = arith.mulf %52, %52 : vector<16x128xf32>
      %cst_31 = arith.constant dense<0.000000e+00> : vector<128xf32>
      %54 = vector.multi_reduction <add>, %53, %cst_31 [0] : vector<16x128xf32> to vector<128xf32>
      %55 = vector.shape_cast %54 : vector<128xf32> to vector<1x128xf32>
      %cst_32 = arith.constant 5.000000e-01 : f32
      %56 = vector.broadcast %cst_32 : f32 to vector<1x128xf32>
      %57 = arith.mulf %55, %56 : vector<1x128xf32>
      %cst_33 = arith.constant 9.99999974E-6 : f32
      %58 = vector.broadcast %cst_33 : f32 to vector<1x128xf32>
      %59 = arith.addf %57, %58 : vector<1x128xf32>
      %60 = math.rsqrt %59 : vector<1x128xf32>
      %61 = arith.mulf %41, %60 : vector<1x128xf32>
      %62 = arith.mulf %48, %61 : vector<1x128xf32>
      %63 = arith.subf %42, %62 : vector<1x128xf32>
      %64 = vector.broadcast %30 : vector<16x1xf32> to vector<16x128xf32>
      %65 = arith.mulf %40, %64 : vector<16x128xf32>
      %cst_34 = arith.constant dense<0.000000e+00> : vector<128xf32>
      %66 = vector.multi_reduction <add>, %65, %cst_34 [0] : vector<16x128xf32> to vector<128xf32>
      %67 = vector.shape_cast %66 : vector<128xf32> to vector<1x128xf32>
      %cst_35 = arith.constant 5.000000e-01 : f32
      %68 = vector.broadcast %cst_35 : f32 to vector<1x128xf32>
      %69 = arith.mulf %67, %68 : vector<1x128xf32>
      %70 = vector.broadcast %69 : vector<1x128xf32> to vector<16x128xf32>
      %71 = arith.subf %40, %70 : vector<16x128xf32>
      %72 = vector.broadcast %30 : vector<16x1xf32> to vector<16x128xf32>
      %73 = arith.mulf %71, %72 : vector<16x128xf32>
      %74 = arith.mulf %73, %73 : vector<16x128xf32>
      %cst_36 = arith.constant dense<0.000000e+00> : vector<128xf32>
      %75 = vector.multi_reduction <add>, %74, %cst_36 [0] : vector<16x128xf32> to vector<128xf32>
      %76 = vector.shape_cast %75 : vector<128xf32> to vector<1x128xf32>
      %cst_37 = arith.constant 5.000000e-01 : f32
      %77 = vector.broadcast %cst_37 : f32 to vector<1x128xf32>
      %78 = arith.mulf %76, %77 : vector<1x128xf32>
      %cst_38 = arith.constant 9.99999974E-6 : f32
      %79 = vector.broadcast %cst_38 : f32 to vector<1x128xf32>
      %80 = arith.addf %78, %79 : vector<1x128xf32>
      %81 = math.rsqrt %80 : vector<1x128xf32>
      %82 = arith.mulf %41, %81 : vector<1x128xf32>
      %83 = arith.mulf %69, %82 : vector<1x128xf32>
      %84 = arith.subf %42, %83 : vector<1x128xf32>
      %85 = vector.broadcast %23 : vector<16x1xf32> to vector<16x128xf32>
      %86 = vector.broadcast %61 : vector<1x128xf32> to vector<16x128xf32>
      %87 = arith.mulf %85, %86 : vector<16x128xf32>
      %88 = vector.broadcast %30 : vector<16x1xf32> to vector<16x128xf32>
      %89 = vector.broadcast %82 : vector<1x128xf32> to vector<16x128xf32>
      %90 = arith.mulf %88, %89 : vector<16x128xf32>
      %91 = arith.addf %87, %90 : vector<16x128xf32>
      %92 = vector.broadcast %23 : vector<16x1xf32> to vector<16x128xf32>
      %93 = vector.broadcast %63 : vector<1x128xf32> to vector<16x128xf32>
      %94 = arith.mulf %92, %93 : vector<16x128xf32>
      %95 = vector.broadcast %30 : vector<16x1xf32> to vector<16x128xf32>
      %96 = vector.broadcast %84 : vector<1x128xf32> to vector<16x128xf32>
      %97 = arith.mulf %95, %96 : vector<16x128xf32>
      %98 = arith.addf %94, %97 : vector<16x128xf32>
      %99 = arith.mulf %40, %91 : vector<16x128xf32>
      %100 = arith.addf %99, %98 : vector<16x128xf32>
      %cst_39 = arith.constant 0.000000e+00 : f32
      %101 = vector.broadcast %cst_39 : f32 to vector<16x128xf32>
      %102 = arith.maximumf %100, %101 : vector<16x128xf32>
      %103 = arith.truncf %102 : vector<16x128xf32> to vector<16x128xbf16>
      %c0_40 = arith.constant 0 : index
      %c0_41 = arith.constant 0 : index
      %104 = vector.load %arg9[%c0_40, %c0_41] : memref<128x128xbf16, #tpu.memory_space<vmem>>, vector<128x128xbf16>
      %cst_42 = arith.constant dense<0.000000e+00> : vector<16x128xf32>
      %105 = tpu.matmul %103, %104, %cst_42 {dimension_numbers = #tpu.dot_dimension_numbers<[1], [0], [0], [1], [0, 0, 1, 1], [], []>} : vector<16x128xbf16>, vector<128x128xbf16>, vector<16x128xf32> -> vector<16x128xf32>
      %c0_43 = arith.constant 0 : index
      %c0_44 = arith.constant 0 : index
      %106 = vector.load %arg10[%c0_43, %c0_44] : memref<1x128xf32, #tpu.memory_space<vmem>>, vector<1x128xf32>
      %107 = vector.broadcast %106 : vector<1x128xf32> to vector<16x128xf32>
      %108 = arith.addf %105, %107 : vector<16x128xf32>
      %c0_45 = arith.constant 0 : index
      %c0_46 = arith.constant 0 : index
      %109 = vector.load %arg11[%c0_45, %c0_46] : memref<1x128xf32, #tpu.memory_space<vmem>>, vector<1x128xf32>
      %c0_47 = arith.constant 0 : index
      %c0_48 = arith.constant 0 : index
      %110 = vector.load %arg12[%c0_47, %c0_48] : memref<1x128xf32, #tpu.memory_space<vmem>>, vector<1x128xf32>
      %111 = vector.broadcast %23 : vector<16x1xf32> to vector<16x128xf32>
      %112 = arith.mulf %108, %111 : vector<16x128xf32>
      %cst_49 = arith.constant dense<0.000000e+00> : vector<128xf32>
      %113 = vector.multi_reduction <add>, %112, %cst_49 [0] : vector<16x128xf32> to vector<128xf32>
      %114 = vector.shape_cast %113 : vector<128xf32> to vector<1x128xf32>
      %cst_50 = arith.constant 5.000000e-01 : f32
      %115 = vector.broadcast %cst_50 : f32 to vector<1x128xf32>
      %116 = arith.mulf %114, %115 : vector<1x128xf32>
      %117 = vector.broadcast %116 : vector<1x128xf32> to vector<16x128xf32>
      %118 = arith.subf %108, %117 : vector<16x128xf32>
      %119 = vector.broadcast %23 : vector<16x1xf32> to vector<16x128xf32>
      %120 = arith.mulf %118, %119 : vector<16x128xf32>
      %121 = arith.mulf %120, %120 : vector<16x128xf32>
      %cst_51 = arith.constant dense<0.000000e+00> : vector<128xf32>
      %122 = vector.multi_reduction <add>, %121, %cst_51 [0] : vector<16x128xf32> to vector<128xf32>
      %123 = vector.shape_cast %122 : vector<128xf32> to vector<1x128xf32>
      %cst_52 = arith.constant 5.000000e-01 : f32
      %124 = vector.broadcast %cst_52 : f32 to vector<1x128xf32>
      %125 = arith.mulf %123, %124 : vector<1x128xf32>
      %cst_53 = arith.constant 9.99999974E-6 : f32
      %126 = vector.broadcast %cst_53 : f32 to vector<1x128xf32>
      %127 = arith.addf %125, %126 : vector<1x128xf32>
      %128 = math.rsqrt %127 : vector<1x128xf32>
      %129 = arith.mulf %109, %128 : vector<1x128xf32>
      %130 = arith.mulf %116, %129 : vector<1x128xf32>
      %131 = arith.subf %110, %130 : vector<1x128xf32>
      %132 = vector.broadcast %30 : vector<16x1xf32> to vector<16x128xf32>
      %133 = arith.mulf %108, %132 : vector<16x128xf32>
      %cst_54 = arith.constant dense<0.000000e+00> : vector<128xf32>
      %134 = vector.multi_reduction <add>, %133, %cst_54 [0] : vector<16x128xf32> to vector<128xf32>
      %135 = vector.shape_cast %134 : vector<128xf32> to vector<1x128xf32>
      %cst_55 = arith.constant 5.000000e-01 : f32
      %136 = vector.broadcast %cst_55 : f32 to vector<1x128xf32>
      %137 = arith.mulf %135, %136 : vector<1x128xf32>
      %138 = vector.broadcast %137 : vector<1x128xf32> to vector<16x128xf32>
      %139 = arith.subf %108, %138 : vector<16x128xf32>
      %140 = vector.broadcast %30 : vector<16x1xf32> to vector<16x128xf32>
      %141 = arith.mulf %139, %140 : vector<16x128xf32>
      %142 = arith.mulf %141, %141 : vector<16x128xf32>
      %cst_56 = arith.constant dense<0.000000e+00> : vector<128xf32>
      %143 = vector.multi_reduction <add>, %142, %cst_56 [0] : vector<16x128xf32> to vector<128xf32>
      %144 = vector.shape_cast %143 : vector<128xf32> to vector<1x128xf32>
      %cst_57 = arith.constant 5.000000e-01 : f32
      %145 = vector.broadcast %cst_57 : f32 to vector<1x128xf32>
      %146 = arith.mulf %144, %145 : vector<1x128xf32>
      %cst_58 = arith.constant 9.99999974E-6 : f32
      %147 = vector.broadcast %cst_58 : f32 to vector<1x128xf32>
      %148 = arith.addf %146, %147 : vector<1x128xf32>
      %149 = math.rsqrt %148 : vector<1x128xf32>
      %150 = arith.mulf %109, %149 : vector<1x128xf32>
      %151 = arith.mulf %137, %150 : vector<1x128xf32>
      %152 = arith.subf %110, %151 : vector<1x128xf32>
      %153 = vector.broadcast %23 : vector<16x1xf32> to vector<16x128xf32>
      %154 = vector.broadcast %129 : vector<1x128xf32> to vector<16x128xf32>
      %155 = arith.mulf %153, %154 : vector<16x128xf32>
      %156 = vector.broadcast %30 : vector<16x1xf32> to vector<16x128xf32>
      %157 = vector.broadcast %150 : vector<1x128xf32> to vector<16x128xf32>
      %158 = arith.mulf %156, %157 : vector<16x128xf32>
      %159 = arith.addf %155, %158 : vector<16x128xf32>
      %160 = vector.broadcast %23 : vector<16x1xf32> to vector<16x128xf32>
      %161 = vector.broadcast %131 : vector<1x128xf32> to vector<16x128xf32>
      %162 = arith.mulf %160, %161 : vector<16x128xf32>
      %163 = vector.broadcast %30 : vector<16x1xf32> to vector<16x128xf32>
      %164 = vector.broadcast %152 : vector<1x128xf32> to vector<16x128xf32>
      %165 = arith.mulf %163, %164 : vector<16x128xf32>
      %166 = arith.addf %162, %165 : vector<16x128xf32>
      %167 = arith.mulf %108, %159 : vector<16x128xf32>
      %168 = arith.addf %167, %166 : vector<16x128xf32>
      %cst_59 = arith.constant 0.000000e+00 : f32
      %169 = vector.broadcast %cst_59 : f32 to vector<16x128xf32>
      %170 = arith.maximumf %168, %169 : vector<16x128xf32>
      %171 = arith.truncf %170 : vector<16x128xf32> to vector<16x128xbf16>
      %c0_60 = arith.constant 0 : index
      %c0_61 = arith.constant 0 : index
      %172 = vector.load %arg13[%c0_60, %c0_61] : memref<128x128xbf16, #tpu.memory_space<vmem>>, vector<128x128xbf16>
      %cst_62 = arith.constant dense<0.000000e+00> : vector<16x128xf32>
      %173 = tpu.matmul %171, %172, %cst_62 {dimension_numbers = #tpu.dot_dimension_numbers<[1], [0], [0], [1], [0, 0, 1, 1], [], []>} : vector<16x128xbf16>, vector<128x128xbf16>, vector<16x128xf32> -> vector<16x128xf32>
      %c0_63 = arith.constant 0 : index
      %c0_64 = arith.constant 0 : index
      %174 = vector.load %arg14[%c0_63, %c0_64] : memref<1x128xf32, #tpu.memory_space<vmem>>, vector<1x128xf32>
      %175 = vector.broadcast %174 : vector<1x128xf32> to vector<16x128xf32>
      %176 = arith.addf %173, %175 : vector<16x128xf32>
      %c0_65 = arith.constant 0 : index
      %c0_66 = arith.constant 0 : index
      %177 = vector.load %arg15[%c0_65, %c0_66] : memref<16x128xf32, #tpu.memory_space<vmem>>, vector<16x128xf32>
      tpu.vector_store %arg15[%c0_65, %c0_66], %176 {strides = array<i32>} : memref<16x128xf32, #tpu.memory_space<vmem>>, vector<16x128xf32>,
    } else {
    }
    return
  }
  func.func @transform_0(%arg0: i32) -> (i32, i32) {
    %c0_i32 = arith.constant 0 : i32
    %c0_i32_0 = arith.constant 0 : i32
    return %c0_i32, %arg0 : i32, i32
  }
  func.func @transform_1(%arg0: i32) -> (i32, i32) {
    %c0_i32 = arith.constant 0 : i32
    %c0_i32_0 = arith.constant 0 : i32
    return %c0_i32, %arg0 : i32, i32
  }
  func.func @transform_2(%arg0: i32) -> (i32, i32) {
    %c0_i32 = arith.constant 0 : i32
    %c0_i32_0 = arith.constant 0 : i32
    return %arg0, %c0_i32 : i32, i32
  }
  func.func @transform_3(%arg0: i32) -> (i32, i32) {
    %c0_i32 = arith.constant 0 : i32
    %c0_i32_0 = arith.constant 0 : i32
    %c0_i32_1 = arith.constant 0 : i32
    return %c0_i32, %c0_i32_0 : i32, i32
  }
  func.func @transform_4(%arg0: i32) -> (i32, i32) {
    %c0_i32 = arith.constant 0 : i32
    %c0_i32_0 = arith.constant 0 : i32
    %c0_i32_1 = arith.constant 0 : i32
    return %c0_i32, %c0_i32_0 : i32, i32
  }
  func.func @transform_5(%arg0: i32) -> (i32, i32) {
    %c0_i32 = arith.constant 0 : i32
    %c0_i32_0 = arith.constant 0 : i32
    %c0_i32_1 = arith.constant 0 : i32
    return %c0_i32, %c0_i32_0 : i32, i32
  }
  func.func @transform_6(%arg0: i32) -> (i32, i32) {
    %c0_i32 = arith.constant 0 : i32
    %c0_i32_0 = arith.constant 0 : i32
    %c0_i32_1 = arith.constant 0 : i32
    return %c0_i32, %c0_i32_0 : i32, i32
  }
  func.func @transform_7(%arg0: i32) -> (i32, i32) {
    %c0_i32 = arith.constant 0 : i32
    %c0_i32_0 = arith.constant 0 : i32
    %c0_i32_1 = arith.constant 0 : i32
    return %c0_i32, %c0_i32_0 : i32, i32
  }
  func.func @transform_8(%arg0: i32) -> (i32, i32) {
    %c0_i32 = arith.constant 0 : i32
    %c0_i32_0 = arith.constant 0 : i32
    %c0_i32_1 = arith.constant 0 : i32
    return %c0_i32, %c0_i32_0 : i32, i32
  }
  func.func @transform_9(%arg0: i32) -> (i32, i32) {
    %c0_i32 = arith.constant 0 : i32
    %c0_i32_0 = arith.constant 0 : i32
    %c0_i32_1 = arith.constant 0 : i32
    return %c0_i32, %c0_i32_0 : i32, i32
  }
  func.func @transform_10(%arg0: i32) -> (i32, i32) {
    %c0_i32 = arith.constant 0 : i32
    %c0_i32_0 = arith.constant 0 : i32
    %c0_i32_1 = arith.constant 0 : i32
    return %c0_i32, %c0_i32_0 : i32, i32
  }
  func.func @transform_11(%arg0: i32) -> (i32, i32) {
    %c0_i32 = arith.constant 0 : i32
    %c0_i32_0 = arith.constant 0 : i32
    %c0_i32_1 = arith.constant 0 : i32
    return %c0_i32, %c0_i32_0 : i32, i32
  }
  func.func @transform_12(%arg0: i32) -> (i32, i32) {
    %c0_i32 = arith.constant 0 : i32
    %c0_i32_0 = arith.constant 0 : i32
    %c0_i32_1 = arith.constant 0 : i32
    return %c0_i32, %c0_i32_0 : i32, i32
  }
  func.func @transform_13(%arg0: i32) -> (i32, i32) {
    %c0_i32 = arith.constant 0 : i32
    %c0_i32_0 = arith.constant 0 : i32
    %c0_i32_1 = arith.constant 0 : i32
    return %c0_i32, %c0_i32_0 : i32, i32
  }
  func.func @transform_14(%arg0: i32) -> (i32, i32) {
    %c0_i32 = arith.constant 0 : i32
    %c0_i32_0 = arith.constant 0 : i32
    %c0_i32_1 = arith.constant 0 : i32
    return %c0_i32, %c0_i32_0 : i32, i32
  }
}

</mosaic_0001>

<llo_original>
// kernel: simclr_forward.1
$region0: #{simclr_forward.1}
  #allocation0 [shape = 'u32[]', space=smem, size = 0x4, offset = 0x4, fixed_abs, tag = 'smem constant byte address 0x4 - core index']
  #allocation1 [shape = 'u32[144,128]{1,0:T(1,128)}', space=vmem, size = 0x12000, scoped, tag = 'internal scratch']
  #allocation2 [shape = 'f32[16,128]{1,0:T(8,128)}', space=vmem, size = 0x2000, scoped, tag = 'scratch operand']
  %s0 = inlined_call_operand.vmem [shape: f32[2,1024], index: 0, kind: input, shape index: {}]
  %s1 = inlined_call_operand.vmem [shape: f32[2,1024], index: 1, kind: input, shape index: {}]
  %s2 = inlined_call_operand.hbm [shape: bf16[1024,128], index: 2, kind: input, shape index: {}]
  %s3 = inlined_call_operand.vmem [shape: f32[1,128], index: 3, kind: input, shape index: {}]
  %s4 = inlined_call_operand.vmem [shape: bf16[128,128], index: 4, kind: input, shape index: {}]
  %s5 = inlined_call_operand.vmem [shape: f32[1,128], index: 5, kind: input, shape index: {}]
  %s6 = inlined_call_operand.vmem [shape: f32[1,128], index: 6, kind: input, shape index: {}]
  %s7 = inlined_call_operand.vmem [shape: f32[1,128], index: 7, kind: input, shape index: {}]
  %s8 = inlined_call_operand.vmem [shape: bf16[128,128], index: 8, kind: input, shape index: {}]
  %s9 = inlined_call_operand.vmem [shape: f32[1,128], index: 9, kind: input, shape index: {}]
  %s10 = inlined_call_operand.vmem [shape: f32[1,128], index: 10, kind: input, shape index: {}]
  %s11 = inlined_call_operand.vmem [shape: f32[1,128], index: 11, kind: input, shape index: {}]
  %s12 = inlined_call_operand.hbm [shape: bf16[128,128], index: 12, kind: input, shape index: {}]
  %s13 = inlined_call_operand.vmem [shape: f32[1,128], index: 13, kind: input, shape index: {}]
  %s14 = inlined_call_operand.vmem [shape: f32[16,128], index: 14, kind: output, shape index: {}]
  %s15 = sld [smem:[#allocation0]]
  $region82: #{simclr_forward.1} parent=0
    _
  %s17 = ssub.s32 1, %s15
  %s18 = scalar_select 0, %s17, %s15
  $region1: #{simclr_forward.1} parent=0
    #allocation3 [shape = 'u8[262144]{0}', space=vmem, size = 0x40000, scoped, tag = 'input window, operand 2, single buffered']
    #allocation4 [shape = 's32[1]{0}', space=sflag, size = 0x4, scoped, tag = 'scoped memory for simclr_forward.1']
    #allocation5 [shape = 'u8[32768]{0}', space=vmem, size = 0x8000, scoped, tag = 'input window, operand 12, single buffered']
    #allocation6 [shape = 's32[1]{0}', space=sflag, size = 0x4, scoped, tag = 'scoped memory for simclr_forward.1']
    %19 = vsyncpa [#allocation4], 0
    %20 = vsyncpa [#allocation6], 0
    // Predicated region
    $region2: #{simclr_forward.1} parent=1 // pred_check
      _
    $region3: #{simclr_forward.1} parent=1 // pred_check_branch
      %22 = sbr.rel (0) target = $region5
    $region4: #{simclr_forward.1} parent=1 // pred_region
      _
    $region5: #{simclr_forward.1} parent=1 // pred_fallthru
      _
    // Predicated region
    $region6: #{simclr_forward.1} parent=1 // pred_check
      _
    $region7: #{simclr_forward.1} parent=1 // pred_check_branch
      %24 = sbr.rel (0) target = $region9
    $region8: #{simclr_forward.1} parent=1 // pred_region
      _
    $region9: #{simclr_forward.1} parent=1 // pred_fallthru
      _
    // Predicated region
    $region10: #{simclr_forward.1} parent=1 // pred_check
      _
    $region11: #{simclr_forward.1} parent=1 // pred_check_branch
      %26 = sbr.rel (0) target = $region13
    $region12: #{simclr_forward.1} parent=1 // pred_region
      %s28 = ssub.s32 8192, 8192
      %29 = vsyncadd [#allocation4], %s28
      %s30 = sshll.u32 [#allocation3], 4
      %s31 = int_to_ptr.vmem [resolvable:$true] %s30
      %36 = dma.hbm_to_vmem [thread:$0]  %s2, 8192, %s31, [#allocation4], 64, 64, 4
    $region13: #{simclr_forward.1} parent=1 // pred_fallthru
      _
    // Predicated region
    $region14: #{simclr_forward.1} parent=1 // pred_check
      _
    $region15: #{simclr_forward.1} parent=1 // pred_check_branch
      %38 = sbr.rel (0) target = $region17
    $region16: #{simclr_forward.1} parent=1 // pred_region
      _
    $region17: #{simclr_forward.1} parent=1 // pred_fallthru
      _
    // Predicated region
    $region18: #{simclr_forward.1} parent=1 // pred_check
      _
    $region19: #{simclr_forward.1} parent=1 // pred_check_branch
      %40 = sbr.rel (0) target = $region21
    $region20: #{simclr_forward.1} parent=1 // pred_region
      _
    $region21: #{simclr_forward.1} parent=1 // pred_fallthru
      _
    // Predicated region
    $region22: #{simclr_forward.1} parent=1 // pred_check
      _
    $region23: #{simclr_forward.1} parent=1 // pred_check_branch
      %42 = sbr.rel (0) target = $region25
    $region24: #{simclr_forward.1} parent=1 // pred_region
      _
    $region25: #{simclr_forward.1} parent=1 // pred_fallthru
      _
    // Predicated region
    $region26: #{simclr_forward.1} parent=1 // pred_check
      _
    $region27: #{simclr_forward.1} parent=1 // pred_check_branch
      %44 = sbr.rel (0) target = $region29
    $region28: #{simclr_forward.1} parent=1 // pred_region
      _
    $region29: #{simclr_forward.1} parent=1 // pred_fallthru
      _
    // Predicated region
    $region30: #{simclr_forward.1} parent=1 // pred_check
      _
    $region31: #{simclr_forward.1} parent=1 // pred_check_branch
      %46 = sbr.rel (0) target = $region33
    $region32: #{simclr_forward.1} parent=1 // pred_region
      _
    $region33: #{simclr_forward.1} parent=1 // pred_fallthru
      _
    // Predicated region
    $region34: #{simclr_forward.1} parent=1 // pred_check
      _
    $region35: #{simclr_forward.1} parent=1 // pred_check_branch
      %48 = sbr.rel (0) target = $region37
    $region36: #{simclr_forward.1} parent=1 // pred_region
      _
    $region37: #{simclr_forward.1} parent=1 // pred_fallthru
      _
    // Predicated region
    $region38: #{simclr_forward.1} parent=1 // pred_check
      _
    $region39: #{simclr_forward.1} parent=1 // pred_check_branch
      %50 = sbr.rel (0) target = $region41
    $region40: #{simclr_forward.1} parent=1 // pred_region
      _
    $region41: #{simclr_forward.1} parent=1 // pred_fallthru
      _
    // Predicated region
    $region42: #{simclr_forward.1} parent=1 // pred_check
      _
    $region43: #{simclr_forward.1} parent=1 // pred_check_branch
      %52 = sbr.rel (0) target = $region45
    $region44: #{simclr_forward.1} parent=1 // pred_region
      _
    $region45: #{simclr_forward.1} parent=1 // pred_fallthru
      _
    // Predicated region
    $region46: #{simclr_forward.1} parent=1 // pred_check
      _
    $region47: #{simclr_forward.1} parent=1 // pred_check_branch
      %54 = sbr.rel (0) target = $region49
    $region48: #{simclr_forward.1} parent=1 // pred_region
      _
    $region49: #{simclr_forward.1} parent=1 // pred_fallthru
      _
    // Predicated region
    $region50: #{simclr_forward.1} parent=1 // pred_check
      _
    $region51: #{simclr_forward.1} parent=1 // pred_check_branch
      %56 = sbr.rel (0) target = $region53
    $region52: #{simclr_forward.1} parent=1 // pred_region
      %s58 = ssub.s32 1024, 1024
      %59 = vsyncadd [#allocation6], %s58
      %s60 = sshll.u32 [#allocation5], 4
      %s61 = int_to_ptr.vmem [resolvable:$true] %s60
      %66 = dma.hbm_to_vmem [thread:$0]  %s12, 1024, %s61, [#allocation6], 64, 64, 4
    $region53: #{simclr_forward.1} parent=1 // pred_fallthru
      _
    // Predicated region
    $region54: #{simclr_forward.1} parent=1 // pred_check
      _
    $region55: #{simclr_forward.1} parent=1 // pred_check_branch
      %68 = sbr.rel (0) target = $region57
    $region56: #{simclr_forward.1} parent=1 // pred_region
      _
    $region57: #{simclr_forward.1} parent=1 // pred_fallthru
      _
    // Predicated region
    $region58: #{simclr_forward.1} parent=1 // pred_check
      _
    $region59: #{simclr_forward.1} parent=1 // pred_check_branch
      %70 = sbr.rel (0) target = $region61
    $region60: #{simclr_forward.1} parent=1 // pred_region
      %71 = dma.done [#allocation4], 8192
    $region61: #{simclr_forward.1} parent=1 // pred_fallthru
      _
    // Predicated region
    $region62: #{simclr_forward.1} parent=1 // pred_check
      _
    $region63: #{simclr_forward.1} parent=1 // pred_check_branch
      %73 = sbr.rel (0) target = $region65
    $region64: #{simclr_forward.1} parent=1 // pred_region
      %74 = dma.done [#allocation6], 1024
    $region65: #{simclr_forward.1} parent=1 // pred_fallthru
      _
    %p76 = scmp.eq.s32.totalorder 0, 0
    // Predicated region
    $region66: #{simclr_forward.1} parent=1 // pred_check
      %p77 = pneg %p76
    $region67: #{simclr_forward.1} parent=1 // pred_check_branch
      %79 = sbr.rel (%p77) target = $region69
    $region68: #{simclr_forward.1} parent=1 // pred_region
      %80 = vst [vmem:[#allocation2] sm:$0xff] 0.0
      %81 = vst [vmem:[#allocation2 + $0x8] sm:$0xff] 0.0
    $region69: #{simclr_forward.1} parent=1 // pred_fallthru
      _
    %v82 = vld [vmem:[%s0] sm:$0xff]
    %v83 = vld [vmem:[%s0 + $0x8] sm:$0xff]
    %v86 = vcombine.high %v82, %v82
    %v88 = vunpack.c.l.s4 1983009808
    %v89 = vunpack.c.0.s8 %v88
    %v90 = vlaneseq
    %v91 = vshrl.u32 %v90, 7
    %v92 = vsub.s32 %v89, %v91
    %v93 = vrot.slane %v82, %v92
    %v95 = vunpack.c.l.s4 1983009808
    %v96 = vunpack.c.0.s8 %v95
    %v97 = vlaneseq
    %v98 = vshrl.u32 %v97, 7
    %v99 = vsub.s32 %v96, %v98
    %v100 = vrot.slane %v86, %v99
    %v101 = vcombine.high %v93, %v93
    %v102 = vcombine.high %v100, %v100
    %v103 = vcombine.high %v83, %v83
    %v105 = vunpack.c.l.s4 1983009808
    %v106 = vunpack.c.0.s8 %v105
    %v107 = vlaneseq
    %v108 = vshrl.u32 %v107, 7
    %v109 = vsub.s32 %v106, %v108
    %v110 = vrot.slane %v83, %v109
    %v112 = vunpack.c.l.s4 1983009808
    %v113 = vunpack.c.0.s8 %v112
    %v114 = vlaneseq
    %v115 = vshrl.u32 %v114, 7
    %v116 = vsub.s32 %v113, %v115
    %v117 = vrot.slane %v103, %v116
    %v118 = vcombine.high %v110, %v110
    %v119 = vcombine.high %v117, %v117
    %v128 = vpack.c.bf16 %v93, %v93
    %v129 = vpack.c.bf16 %v101, %v101
    %v130 = vpack.c.bf16 %v100, %v100
    %v131 = vpack.c.bf16 %v102, %v102
    %v132 = vpack.c.bf16 %v110, %v110
    %v133 = vpack.c.bf16 %v118, %v118
    %v134 = vpack.c.bf16 %v117, %v117
    %v135 = vpack.c.bf16 %v119, %v119
    %v136 = vld [vmem:[%s1] sm:$0xff]
    %v137 = vld [vmem:[%s1 + $0x8] sm:$0xff]
    %v140 = vcombine.high %v136, %v136
    %v142 = vunpack.c.l.s4 1983009808
    %v143 = vunpack.c.0.s8 %v142
    %v144 = vlaneseq
    %v145 = vshrl.u32 %v144, 7
    %v146 = vsub.s32 %v143, %v145
    %v147 = vrot.slane %v136, %v146
    %v149 = vunpack.c.l.s4 1983009808
    %v150 = vunpack.c.0.s8 %v149
    %v151 = vlaneseq
    %v152 = vshrl.u32 %v151, 7
    %v153 = vsub.s32 %v150, %v152
    %v154 = vrot.slane %v140, %v153
    %v155 = vcombine.high %v147, %v147
    %v156 = vcombine.high %v154, %v154
    %v157 = vcombine.high %v137, %v137
    %v159 = vunpack.c.l.s4 1983009808
    %v160 = vunpack.c.0.s8 %v159
    %v161 = vlaneseq
    %v162 = vshrl.u32 %v161, 7
    %v163 = vsub.s32 %v160, %v162
    %v164 = vrot.slane %v137, %v163
    %v166 = vunpack.c.l.s4 1983009808
    %v167 = vunpack.c.0.s8 %v166
    %v168 = vlaneseq
    %v169 = vshrl.u32 %v168, 7
    %v170 = vsub.s32 %v167, %v169
    %v171 = vrot.slane %v157, %v170
    %v172 = vcombine.high %v164, %v164
    %v173 = vcombine.high %v171, %v171
    %v182 = vpack.c.bf16 %v147, %v147
    %v183 = vpack.c.bf16 %v155, %v155
    %v184 = vpack.c.bf16 %v154, %v154
    %v185 = vpack.c.bf16 %v156, %v156
    %v186 = vpack.c.bf16 %v164, %v164
    %v187 = vpack.c.bf16 %v172, %v172
    %v188 = vpack.c.bf16 %v171, %v171
    %v189 = vpack.c.bf16 %v173, %v173
    %v190 = vld [vmem:[#allocation3] sm:$0xf]
    %v191 = vld [vmem:[#allocation3 + $0x4] sm:$0xf]
    %v192 = vld [vmem:[#allocation3 + $0x8] sm:$0xf]
    %v193 = vld [vmem:[#allocation3 + $0xc] sm:$0xf]
    %v194 = vld [vmem:[#allocation3 + $0x10] sm:$0xf]
    %v195 = vld [vmem:[#allocation3 + $0x14] sm:$0xf]
    %v196 = vld [vmem:[#allocation3 + $0x18] sm:$0xf]
    %v197 = vld [vmem:[#allocation3 + $0x1c] sm:$0xf]
    %v198 = vld [vmem:[#allocation3 + $0x20] sm:$0xf]
    %v199 = vld [vmem:[#allocation3 + $0x24] sm:$0xf]
    %v200 = vld [vmem:[#allocation3 + $0x28] sm:$0xf]
    %v201 = vld [vmem:[#allocation3 + $0x2c] sm:$0xf]
    %v202 = vld [vmem:[#allocation3 + $0x30] sm:$0xf]
    %v203 = vld [vmem:[#allocation3 + $0x34] sm:$0xf]
    %v204 = vld [vmem:[#allocation3 + $0x38] sm:$0xf]
    %v205 = vld [vmem:[#allocation3 + $0x3c] sm:$0xf]
    %v206 = vld [vmem:[#allocation3 + $0x40] sm:$0xf]
    %v207 = vld [vmem:[#allocation3 + $0x44] sm:$0xf]
    %v208 = vld [vmem:[#allocation3 + $0x48] sm:$0xf]
    %v209 = vld [vmem:[#allocation3 + $0x4c] sm:$0xf]
    %v210 = vld [vmem:[#allocation3 + $0x50] sm:$0xf]
    %v211 = vld [vmem:[#allocation3 + $0x54] sm:$0xf]
    %v212 = vld [vmem:[#allocation3 + $0x58] sm:$0xf]
    %v213 = vld [vmem:[#allocation3 + $0x5c] sm:$0xf]
    %v214 = vld [vmem:[#allocation3 + $0x60] sm:$0xf]
    %v215 = vld [vmem:[#allocation3 + $0x64] sm:$0xf]
    %v216 = vld [vmem:[#allocation3 + $0x68] sm:$0xf]
    %v217 = vld [vmem:[#allocation3 + $0x6c] sm:$0xf]
    %v218 = vld [vmem:[#allocation3 + $0x70] sm:$0xf]
    %v219 = vld [vmem:[#allocation3 + $0x74] sm:$0xf]
    %v220 = vld [vmem:[#allocation3 + $0x78] sm:$0xf]
    %v221 = vld [vmem:[#allocation3 + $0x7c] sm:$0xf]
    %v222 = vld [vmem:[#allocation3 + $0x80] sm:$0xf]
    %v223 = vld [vmem:[#allocation3 + $0x84] sm:$0xf]
    %v224 = vld [vmem:[#allocation3 + $0x88] sm:$0xf]
    %v225 = vld [vmem:[#allocation3 + $0x8c] sm:$0xf]
    %v226 = vld [vmem:[#allocation3 + $0x90] sm:$0xf]
    %v227 = vld [vmem:[#allocation3 + $0x94] sm:$0xf]
    %v228 = vld [vmem:[#allocation3 + $0x98] sm:$0xf]
    %v229 = vld [vmem:[#allocation3 + $0x9c] sm:$0xf]
    %v230 = vld [vmem:[#allocation3 + $0xa0] sm:$0xf]
    %v231 = vld [vmem:[#allocation3 + $0xa4] sm:$0xf]
    %v232 = vld [vmem:[#allocation3 + $0xa8] sm:$0xf]
    %v233 = vld [vmem:[#allocation3 + $0xac] sm:$0xf]
    %v234 = vld [vmem:[#allocation3 + $0xb0] sm:$0xf]
    %v235 = vld [vmem:[#allocation3 + $0xb4] sm:$0xf]
    %v236 = vld [vmem:[#allocation3 + $0xb8] sm:$0xf]
    %v237 = vld [vmem:[#allocation3 + $0xbc] sm:$0xf]
    %v238 = vld [vmem:[#allocation3 + $0xc0] sm:$0xf]
    %v239 = vld [vmem:[#allocation3 + $0xc4] sm:$0xf]
    %v240 = vld [vmem:[#allocation3 + $0xc8] sm:$0xf]
    %v241 = vld [vmem:[#allocation3 + $0xcc] sm:$0xf]
    %v242 = vld [vmem:[#allocation3 + $0xd0] sm:$0xf]
    %v243 = vld [vmem:[#allocation3 + $0xd4] sm:$0xf]
    %v244 = vld [vmem:[#allocation3 + $0xd8] sm:$0xf]
    %v245 = vld [vmem:[#allocation3 + $0xdc] sm:$0xf]
    %v246 = vld [vmem:[#allocation3 + $0xe0] sm:$0xf]
    %v247 = vld [vmem:[#allocation3 + $0xe4] sm:$0xf]
    %v248 = vld [vmem:[#allocation3 + $0xe8] sm:$0xf]
    %v249 = vld [vmem:[#allocation3 + $0xec] sm:$0xf]
    %v250 = vld [vmem:[#allocation3 + $0xf0] sm:$0xf]
    %v251 = vld [vmem:[#allocation3 + $0xf4] sm:$0xf]
    %v252 = vld [vmem:[#allocation3 + $0xf8] sm:$0xf]
    %v253 = vld [vmem:[#allocation3 + $0xfc] sm:$0xf]
    %v254 = vld [vmem:[#allocation3 + $0x100] sm:$0xf]
    %v255 = vld [vmem:[#allocation3 + $0x104] sm:$0xf]
    %v256 = vld [vmem:[#allocation3 + $0x108] sm:$0xf]
    %v257 = vld [vmem:[#allocation3 + $0x10c] sm:$0xf]
    %v258 = vld [vmem:[#allocation3 + $0x110] sm:$0xf]
    %v259 = vld [vmem:[#allocation3 + $0x114] sm:$0xf]
    %v260 = vld [vmem:[#allocation3 + $0x118] sm:$0xf]
    %v261 = vld [vmem:[#allocation3 + $0x11c] sm:$0xf]
    %v262 = vld [vmem:[#allocation3 + $0x120] sm:$0xf]
    %v263 = vld [vmem:[#allocation3 + $0x124] sm:$0xf]
    %v264 = vld [vmem:[#allocation3 + $0x128] sm:$0xf]
    %v265 = vld [vmem:[#allocation3 + $0x12c] sm:$0xf]
    %v266 = vld [vmem:[#allocation3 + $0x130] sm:$0xf]
    %v267 = vld [vmem:[#allocation3 + $0x134] sm:$0xf]
    %v268 = vld [vmem:[#allocation3 + $0x138] sm:$0xf]
    %v269 = vld [vmem:[#allocation3 + $0x13c] sm:$0xf]
    %v270 = vld [vmem:[#allocation3 + $0x140] sm:$0xf]
    %v271 = vld [vmem:[#allocation3 + $0x144] sm:$0xf]
    %v272 = vld [vmem:[#allocation3 + $0x148] sm:$0xf]
    %v273 = vld [vmem:[#allocation3 + $0x14c] sm:$0xf]
    %v274 = vld [vmem:[#allocation3 + $0x150] sm:$0xf]
    %v275 = vld [vmem:[#allocation3 + $0x154] sm:$0xf]
    %v276 = vld [vmem:[#allocation3 + $0x158] sm:$0xf]
    %v277 = vld [vmem:[#allocation3 + $0x15c] sm:$0xf]
    %v278 = vld [vmem:[#allocation3 + $0x160] sm:$0xf]
    %v279 = vld [vmem:[#allocation3 + $0x164] sm:$0xf]
    %v280 = vld [vmem:[#allocation3 + $0x168] sm:$0xf]
    %v281 = vld [vmem:[#allocation3 + $0x16c] sm:$0xf]
    %v282 = vld [vmem:[#allocation3 + $0x170] sm:$0xf]
    %v283 = vld [vmem:[#allocation3 + $0x174] sm:$0xf]
    %v284 = vld [vmem:[#allocation3 + $0x178] sm:$0xf]
    %v285 = vld [vmem:[#allocation3 + $0x17c] sm:$0xf]
    %v286 = vld [vmem:[#allocation3 + $0x180] sm:$0xf]
    %v287 = vld [vmem:[#allocation3 + $0x184] sm:$0xf]
    %v288 = vld [vmem:[#allocation3 + $0x188] sm:$0xf]
    %v289 = vld [vmem:[#allocation3 + $0x18c] sm:$0xf]
    %v290 = vld [vmem:[#allocation3 + $0x190] sm:$0xf]
    %v291 = vld [vmem:[#allocation3 + $0x194] sm:$0xf]
    %v292 = vld [vmem:[#allocation3 + $0x198] sm:$0xf]
    %v293 = vld [vmem:[#allocation3 + $0x19c] sm:$0xf]
    %v294 = vld [vmem:[#allocation3 + $0x1a0] sm:$0xf]
    %v295 = vld [vmem:[#allocation3 + $0x1a4] sm:$0xf]
    %v296 = vld [vmem:[#allocation3 + $0x1a8] sm:$0xf]
    %v297 = vld [vmem:[#allocation3 + $0x1ac] sm:$0xf]
    %v298 = vld [vmem:[#allocation3 + $0x1b0] sm:$0xf]
    %v299 = vld [vmem:[#allocation3 + $0x1b4] sm:$0xf]
    %v300 = vld [vmem:[#allocation3 + $0x1b8] sm:$0xf]
    %v301 = vld [vmem:[#allocation3 + $0x1bc] sm:$0xf]
    %v302 = vld [vmem:[#allocation3 + $0x1c0] sm:$0xf]
    %v303 = vld [vmem:[#allocation3 + $0x1c4] sm:$0xf]
    %v304 = vld [vmem:[#allocation3 + $0x1c8] sm:$0xf]
    %v305 = vld [vmem:[#allocation3 + $0x1cc] sm:$0xf]
    %v306 = vld [vmem:[#allocation3 + $0x1d0] sm:$0xf]
    %v307 = vld [vmem:[#allocation3 + $0x1d4] sm:$0xf]
    %v308 = vld [vmem:[#allocation3 + $0x1d8] sm:$0xf]
    %v309 = vld [vmem:[#allocation3 + $0x1dc] sm:$0xf]
    %v310 = vld [vmem:[#allocation3 + $0x1e0] sm:$0xf]
    %v311 = vld [vmem:[#allocation3 + $0x1e4] sm:$0xf]
    %v312 = vld [vmem:[#allocation3 + $0x1e8] sm:$0xf]
    %v313 = vld [vmem:[#allocation3 + $0x1ec] sm:$0xf]
    %v314 = vld [vmem:[#allocation3 + $0x1f0] sm:$0xf]
    %v315 = vld [vmem:[#allocation3 + $0x1f4] sm:$0xf]
    %v316 = vld [vmem:[#allocation3 + $0x1f8] sm:$0xf]
    %v317 = vld [vmem:[#allocation3 + $0x1fc] sm:$0xf]
    %v318 = vld [vmem:[#allocation2] sm:$0x3]
    %v447 = vunpack.c.l.b16 %v190
    %v448 = vunpack.c.l.b16 %v191
    %v449 = vunpack.c.l.b16 %v192
    %v450 = vunpack.c.l.b16 %v193
    %v451 = vunpack.c.l.b16 %v194
    %v452 = vunpack.c.l.b16 %v195
    %v453 = vunpack.c.l.b16 %v196
    %v454 = vunpack.c.l.b16 %v197
    %v455 = vunpack.c.l.b16 %v198
    %v456 = vunpack.c.l.b16 %v199
    %v457 = vunpack.c.l.b16 %v200
    %v458 = vunpack.c.l.b16 %v201
    %v459 = vunpack.c.l.b16 %v202
    %v460 = vunpack.c.l.b16 %v203
    %v461 = vunpack.c.l.b16 %v204
    %v462 = vunpack.c.l.b16 %v205
    %v463 = vunpack.c.l.b16 %v206
    %v464 = vunpack.c.l.b16 %v207
    %v465 = vunpack.c.l.b16 %v208
    %v466 = vunpack.c.l.b16 %v209
    %v467 = vunpack.c.l.b16 %v210
    %v468 = vunpack.c.l.b16 %v211
    %v469 = vunpack.c.l.b16 %v212
    %v470 = vunpack.c.l.b16 %v213
    %v471 = vunpack.c.l.b16 %v214
    %v472 = vunpack.c.l.b16 %v215
    %v473 = vunpack.c.l.b16 %v216
    %v474 = vunpack.c.l.b16 %v217
    %v475 = vunpack.c.l.b16 %v218
    %v476 = vunpack.c.l.b16 %v219
    %v477 = vunpack.c.l.b16 %v220
    %v478 = vunpack.c.l.b16 %v221
    %v479 = vunpack.c.l.b16 %v222
    %v480 = vunpack.c.l.b16 %v223
    %v481 = vunpack.c.l.b16 %v224
    %v482 = vunpack.c.l.b16 %v225
    %v483 = vunpack.c.l.b16 %v226
    %v484 = vunpack.c.l.b16 %v227
    %v485 = vunpack.c.l.b16 %v228
    %v486 = vunpack.c.l.b16 %v229
    %v487 = vunpack.c.l.b16 %v230
    %v488 = vunpack.c.l.b16 %v231
    %v489 = vunpack.c.l.b16 %v232
    %v490 = vunpack.c.l.b16 %v233
    %v491 = vunpack.c.l.b16 %v234
    %v492 = vunpack.c.l.b16 %v235
    %v493 = vunpack.c.l.b16 %v236
    %v494 = vunpack.c.l.b16 %v237
    %v495 = vunpack.c.l.b16 %v238
    %v496 = vunpack.c.l.b16 %v239
    %v497 = vunpack.c.l.b16 %v240
    %v498 = vunpack.c.l.b16 %v241
    %v499 = vunpack.c.l.b16 %v242
    %v500 = vunpack.c.l.b16 %v243
    %v501 = vunpack.c.l.b16 %v244
    %v502 = vunpack.c.l.b16 %v245
    %v503 = vunpack.c.l.b16 %v246
    %v504 = vunpack.c.l.b16 %v247
    %v505 = vunpack.c.l.b16 %v248
    %v506 = vunpack.c.l.b16 %v249
    %v507 = vunpack.c.l.b16 %v250
    %v508 = vunpack.c.l.b16 %v251
    %v509 = vunpack.c.l.b16 %v252
    %v510 = vunpack.c.l.b16 %v253
    %v511 = vunpack.c.l.b16 %v254
    %v512 = vunpack.c.l.b16 %v255
    %v513 = vunpack.c.l.b16 %v256
    %v514 = vunpack.c.l.b16 %v257
    %v515 = vunpack.c.l.b16 %v258
    %v516 = vunpack.c.l.b16 %v259
    %v517 = vunpack.c.l.b16 %v260
    %v518 = vunpack.c.l.b16 %v261
    %v519 = vunpack.c.l.b16 %v262
    %v520 = vunpack.c.l.b16 %v263
    %v521 = vunpack.c.l.b16 %v264
    %v522 = vunpack.c.l.b16 %v265
    %v523 = vunpack.c.l.b16 %v266
    %v524 = vunpack.c.l.b16 %v267
    %v525 = vunpack.c.l.b16 %v268
    %v526 = vunpack.c.l.b16 %v269
    %v527 = vunpack.c.l.b16 %v270
    %v528 = vunpack.c.l.b16 %v271
    %v529 = vunpack.c.l.b16 %v272
    %v530 = vunpack.c.l.b16 %v273
    %v531 = vunpack.c.l.b16 %v274
    %v532 = vunpack.c.l.b16 %v275
    %v533 = vunpack.c.l.b16 %v276
    %v534 = vunpack.c.l.b16 %v277
    %v535 = vunpack.c.l.b16 %v278
    %v536 = vunpack.c.l.b16 %v279
    %v537 = vunpack.c.l.b16 %v280
    %v538 = vunpack.c.l.b16 %v281
    %v539 = vunpack.c.l.b16 %v282
    %v540 = vunpack.c.l.b16 %v283
    %v541 = vunpack.c.l.b16 %v284
    %v542 = vunpack.c.l.b16 %v285
    %v543 = vunpack.c.l.b16 %v286
    %v544 = vunpack.c.l.b16 %v287
    %v545 = vunpack.c.l.b16 %v288
    %v546 = vunpack.c.l.b16 %v289
    %v547 = vunpack.c.l.b16 %v290
    %v548 = vunpack.c.l.b16 %v291
    %v549 = vunpack.c.l.b16 %v292
    %v550 = vunpack.c.l.b16 %v293
    %v551 = vunpack.c.l.b16 %v294
    %v552 = vunpack.c.l.b16 %v295
    %v553 = vunpack.c.l.b16 %v296
    %v554 = vunpack.c.l.b16 %v297
    %v555 = vunpack.c.l.b16 %v298
    %v556 = vunpack.c.l.b16 %v299
    %v557 = vunpack.c.l.b16 %v300
    %v558 = vunpack.c.l.b16 %v301
    %v559 = vunpack.c.l.b16 %v302
    %v560 = vunpack.c.l.b16 %v303
    %v561 = vunpack.c.l.b16 %v304
    %v562 = vunpack.c.l.b16 %v305
    %v563 = vunpack.c.l.b16 %v306
    %v564 = vunpack.c.l.b16 %v307
    %v565 = vunpack.c.l.b16 %v308
    %v566 = vunpack.c.l.b16 %v309
    %v567 = vunpack.c.l.b16 %v310
    %v568 = vunpack.c.l.b16 %v311
    %v569 = vunpack.c.l.b16 %v312
    %v570 = vunpack.c.l.b16 %v313
    %v571 = vunpack.c.l.b16 %v314
    %v572 = vunpack.c.l.b16 %v315
    %v573 = vunpack.c.l.b16 %v316
    %v574 = vunpack.c.l.b16 %v317
    %v575 = vpack.c.b16 %v448, %v447
    %v576 = vpack.c.b16 %v450, %v449
    %v577 = vpack.c.b16 %v452, %v451
    %v578 = vpack.c.b16 %v454, %v453
    %v579 = vpack.c.b16 %v456, %v455
    %v580 = vpack.c.b16 %v458, %v457
    %v581 = vpack.c.b16 %v460, %v459
    %v582 = vpack.c.b16 %v462, %v461
    %v583 = vpack.c.b16 %v464, %v463
    %v584 = vpack.c.b16 %v466, %v465
    %v585 = vpack.c.b16 %v468, %v467
    %v586 = vpack.c.b16 %v470, %v469
    %v587 = vpack.c.b16 %v472, %v471
    %v588 = vpack.c.b16 %v474, %v473
    %v589 = vpack.c.b16 %v476, %v475
    %v590 = vpack.c.b16 %v478, %v477
    %v591 = vpack.c.b16 %v480, %v479
    %v592 = vpack.c.b16 %v482, %v481
    %v593 = vpack.c.b16 %v484, %v483
    %v594 = vpack.c.b16 %v486, %v485
    %v595 = vpack.c.b16 %v488, %v487
    %v596 = vpack.c.b16 %v490, %v489
    %v597 = vpack.c.b16 %v492, %v491
    %v598 = vpack.c.b16 %v494, %v493
    %v599 = vpack.c.b16 %v496, %v495
    %v600 = vpack.c.b16 %v498, %v497
    %v601 = vpack.c.b16 %v500, %v499
    %v602 = vpack.c.b16 %v502, %v501
    %v603 = vpack.c.b16 %v504, %v503
    %v604 = vpack.c.b16 %v506, %v505
    %v605 = vpack.c.b16 %v508, %v507
    %v606 = vpack.c.b16 %v510, %v509
    %v607 = vpack.c.b16 %v512, %v511
    %v608 = vpack.c.b16 %v514, %v513
    %v609 = vpack.c.b16 %v516, %v515
    %v610 = vpack.c.b16 %v518, %v517
    %v611 = vpack.c.b16 %v520, %v519
    %v612 = vpack.c.b16 %v522, %v521
    %v613 = vpack.c.b16 %v524, %v523
    %v614 = vpack.c.b16 %v526, %v525
    %v615 = vpack.c.b16 %v528, %v527
    %v616 = vpack.c.b16 %v530, %v529
    %v617 = vpack.c.b16 %v532, %v531
    %v618 = vpack.c.b16 %v534, %v533
    %v619 = vpack.c.b16 %v536, %v535
    %v620 = vpack.c.b16 %v538, %v537
    %v621 = vpack.c.b16 %v540, %v539
    %v622 = vpack.c.b16 %v542, %v541
    %v623 = vpack.c.b16 %v544, %v543
    %v624 = vpack.c.b16 %v546, %v545
    %v625 = vpack.c.b16 %v548, %v547
    %v626 = vpack.c.b16 %v550, %v549
    %v627 = vpack.c.b16 %v552, %v551
    %v628 = vpack.c.b16 %v554, %v553
    %v629 = vpack.c.b16 %v556, %v555
    %v630 = vpack.c.b16 %v558, %v557
    %v631 = vpack.c.b16 %v560, %v559
    %v632 = vpack.c.b16 %v562, %v561
    %v633 = vpack.c.b16 %v564, %v563
    %v634 = vpack.c.b16 %v566, %v565
    %v635 = vpack.c.b16 %v568, %v567
    %v636 = vpack.c.b16 %v570, %v569
    %v637 = vpack.c.b16 %v572, %v571
    %v638 = vpack.c.b16 %v574, %v573
    %703 = vmatprep.subr.bf16.mxu0 0
    %704 = vmatpush1.bf16.msra.mxu0 %v575
    %705 = vmatprep.subr.bf16.mxu0 0
    %706 = vmatpush1.bf16.msra.mxu0 %v576
    %707 = vmatprep.subr.bf16.mxu0 0
    %708 = vmatpush1.bf16.msra.mxu0 %v577
    %709 = vmatprep.subr.bf16.mxu0 0
    %710 = vmatpush1.bf16.msra.mxu0 %v578
    %711 = vmatprep.subr.bf16.mxu0 0
    %712 = vmatpush1.bf16.msra.mxu0 %v579
    %713 = vmatprep.subr.bf16.mxu0 0
    %714 = vmatpush1.bf16.msra.mxu0 %v580
    %715 = vmatprep.subr.bf16.mxu0 0
    %716 = vmatpush1.bf16.msra.mxu0 %v581
    %717 = vmatprep.subr.bf16.mxu0 0
    %718 = vmatpush1.bf16.msra.mxu0 %v582
    %719 = vmatprep.subr.bf16.mxu0 0
    %720 = vmatpush1.bf16.msra.mxu0 %v583
    %721 = vmatprep.subr.bf16.mxu0 0
    %722 = vmatpush1.bf16.msra.mxu0 %v584
    %723 = vmatprep.subr.bf16.mxu0 0
    %724 = vmatpush1.bf16.msra.mxu0 %v585
    %725 = vmatprep.subr.bf16.mxu0 0
    %726 = vmatpush1.bf16.msra.mxu0 %v586
    %727 = vmatprep.subr.bf16.mxu0 0
    %728 = vmatpush1.bf16.msra.mxu0 %v587
    %729 = vmatprep.subr.bf16.mxu0 0
    %730 = vmatpush1.bf16.msra.mxu0 %v588
    %731 = vmatprep.subr.bf16.mxu0 0
    %732 = vmatpush1.bf16.msra.mxu0 %v589
    %733 = vmatprep.subr.bf16.mxu0 0
    %734 = vmatpush1.bf16.msra.mxu0 %v590
    %735 = vmatprep.mubr.bf16.mxu0 %v129
    %736 = vmatmul.mubr.bf16.gmra.mrb[0].mxu0 %v128
    %v737 = vpop.f32.mrb[0].mxu0
    %v738 = vadd.f32 0.0, %v737
    %v739 = vpop.f32.mrb[0].mxu0
    %v740 = vpop.f32.mrb[0].mxu0
    %v741 = vpop.f32.mrb[0].mxu0
    %742 = vdwg.mxu0
    %743 = vmatprep.subr.bf16.mxu0 0
    %744 = vmatpush1.bf16.msra.mxu0 %v591
    %745 = vmatprep.subr.bf16.mxu0 0
    %746 = vmatpush1.bf16.msra.mxu0 %v592
    %747 = vmatprep.subr.bf16.mxu0 0
    %748 = vmatpush1.bf16.msra.mxu0 %v593
    %749 = vmatprep.subr.bf16.mxu0 0
    %750 = vmatpush1.bf16.msra.mxu0 %v594
    %751 = vmatprep.subr.bf16.mxu0 0
    %752 = vmatpush1.bf16.msra.mxu0 %v595
    %753 = vmatprep.subr.bf16.mxu0 0
    %754 = vmatpush1.bf16.msra.mxu0 %v596
    %755 = vmatprep.subr.bf16.mxu0 0
    %756 = vmatpush1.bf16.msra.mxu0 %v597
    %757 = vmatprep.subr.bf16.mxu0 0
    %758 = vmatpush1.bf16.msra.mxu0 %v598
    %759 = vmatprep.subr.bf16.mxu0 0
    %760 = vmatpush1.bf16.msra.mxu0 %v599
    %761 = vmatprep.subr.bf16.mxu0 0
    %762 = vmatpush1.bf16.msra.mxu0 %v600
    %763 = vmatprep.subr.bf16.mxu0 0
    %764 = vmatpush1.bf16.msra.mxu0 %v601
    %765 = vmatprep.subr.bf16.mxu0 0
    %766 = vmatpush1.bf16.msra.mxu0 %v602
    %767 = vmatprep.subr.bf16.mxu0 0
    %768 = vmatpush1.bf16.msra.mxu0 %v603
    %769 = vmatprep.subr.bf16.mxu0 0
    %770 = vmatpush1.bf16.msra.mxu0 %v604
    %771 = vmatprep.subr.bf16.mxu0 0
    %772 = vmatpush1.bf16.msra.mxu0 %v605
    %773 = vmatprep.subr.bf16.mxu0 0
    %774 = vmatpush1.bf16.msra.mxu0 %v606
    %775 = vmatprep.mubr.bf16.mxu0 %v131
    %776 = vmatmul.mubr.bf16.gmra.mrb[0].mxu0 %v130
    %v777 = vpop.f32.mrb[0].mxu0
    %v778 = vadd.f32 %v738, %v777
    %v779 = vpop.f32.mrb[0].mxu0
    %v780 = vpop.f32.mrb[0].mxu0
    %v781 = vpop.f32.mrb[0].mxu0
    %782 = vdwg.mxu0
    %783 = vmatprep.subr.bf16.mxu0 0
    %784 = vmatpush1.bf16.msra.mxu0 %v607
    %785 = vmatprep.subr.bf16.mxu0 0
    %786 = vmatpush1.bf16.msra.mxu0 %v608
    %787 = vmatprep.subr.bf16.mxu0 0
    %788 = vmatpush1.bf16.msra.mxu0 %v609
    %789 = vmatprep.subr.bf16.mxu0 0
    %790 = vmatpush1.bf16.msra.mxu0 %v610
    %791 = vmatprep.subr.bf16.mxu0 0
    %792 = vmatpush1.bf16.msra.mxu0 %v611
    %793 = vmatprep.subr.bf16.mxu0 0
    %794 = vmatpush1.bf16.msra.mxu0 %v612
    %795 = vmatprep.subr.bf16.mxu0 0
    %796 = vmatpush1.bf16.msra.mxu0 %v613
    %797 = vmatprep.subr.bf16.mxu0 0
    %798 = vmatpush1.bf16.msra.mxu0 %v614
    %799 = vmatprep.subr.bf16.mxu0 0
    %800 = vmatpush1.bf16.msra.mxu0 %v615
    %801 = vmatprep.subr.bf16.mxu0 0
    %802 = vmatpush1.bf16.msra.mxu0 %v616
    %803 = vmatprep.subr.bf16.mxu0 0
    %804 = vmatpush1.bf16.msra.mxu0 %v617
    %805 = vmatprep.subr.bf16.mxu0 0
    %806 = vmatpush1.bf16.msra.mxu0 %v618
    %807 = vmatprep.subr.bf16.mxu0 0
    %808 = vmatpush1.bf16.msra.mxu0 %v619
    %809 = vmatprep.subr.bf16.mxu0 0
    %810 = vmatpush1.bf16.msra.mxu0 %v620
    %811 = vmatprep.subr.bf16.mxu0 0
    %812 = vmatpush1.bf16.msra.mxu0 %v621
    %813 = vmatprep.subr.bf16.mxu0 0
    %814 = vmatpush1.bf16.msra.mxu0 %v622
    %815 = vmatprep.mubr.bf16.mxu0 %v133
    %816 = vmatmul.mubr.bf16.gmra.mrb[0].mxu0 %v132
    %v817 = vpop.f32.mrb[0].mxu0
    %v818 = vadd.f32 %v778, %v817
    %v819 = vpop.f32.mrb[0].mxu0
    %v820 = vpop.f32.mrb[0].mxu0
    %v821 = vpop.f32.mrb[0].mxu0
    %822 = vdwg.mxu0
    %823 = vmatprep.subr.bf16.mxu0 0
    %824 = vmatpush1.bf16.msra.mxu0 %v623
    %825 = vmatprep.subr.bf16.mxu0 0
    %826 = vmatpush1.bf16.msra.mxu0 %v624
    %827 = vmatprep.subr.bf16.mxu0 0
    %828 = vmatpush1.bf16.msra.mxu0 %v625
    %829 = vmatprep.subr.bf16.mxu0 0
    %830 = vmatpush1.bf16.msra.mxu0 %v626
    %831 = vmatprep.subr.bf16.mxu0 0
    %832 = vmatpush1.bf16.msra.mxu0 %v627
    %833 = vmatprep.subr.bf16.mxu0 0
    %834 = vmatpush1.bf16.msra.mxu0 %v628
    %835 = vmatprep.subr.bf16.mxu0 0
    %836 = vmatpush1.bf16.msra.mxu0 %v629
    %837 = vmatprep.subr.bf16.mxu0 0
    %838 = vmatpush1.bf16.msra.mxu0 %v630
    %839 = vmatprep.subr.bf16.mxu0 0
    %840 = vmatpush1.bf16.msra.mxu0 %v631
    %841 = vmatprep.subr.bf16.mxu0 0
    %842 = vmatpush1.bf16.msra.mxu0 %v632
    %843 = vmatprep.subr.bf16.mxu0 0
    %844 = vmatpush1.bf16.msra.mxu0 %v633
    %845 = vmatprep.subr.bf16.mxu0 0
    %846 = vmatpush1.bf16.msra.mxu0 %v634
    %847 = vmatprep.subr.bf16.mxu0 0
    %848 = vmatpush1.bf16.msra.mxu0 %v635
    %849 = vmatprep.subr.bf16.mxu0 0
    %850 = vmatpush1.bf16.msra.mxu0 %v636
    %851 = vmatprep.subr.bf16.mxu0 0
    %852 = vmatpush1.bf16.msra.mxu0 %v637
    %853 = vmatprep.subr.bf16.mxu0 0
    %854 = vmatpush1.bf16.msra.mxu0 %v638
    %855 = vmatprep.mubr.bf16.mxu0 %v135
    %856 = vmatmul.mubr.bf16.gmra.mrb[0].mxu0 %v134
    %v857 = vpop.f32.mrb[0].mxu0
    %v858 = vadd.f32 %v818, %v857
    %v859 = vpop.f32.mrb[0].mxu0
    %v860 = vpop.f32.mrb[0].mxu0
    %v861 = vpop.f32.mrb[0].mxu0
    %862 = vdwg.mxu0
    %v863 = vadd.f32 %v318, %v858
    %864 = vst [vmem:[#allocation2] sm:$0x3] %v863
    %v865 = vld [vmem:[#allocation2 + $0x8] sm:$0x3]
    %866 = vmatprep.subr.bf16.mxu0 0
    %867 = vmatpush1.bf16.msra.mxu0 %v575
    %868 = vmatprep.subr.bf16.mxu0 0
    %869 = vmatpush1.bf16.msra.mxu0 %v576
    %870 = vmatprep.subr.bf16.mxu0 0
    %871 = vmatpush1.bf16.msra.mxu0 %v577
    %872 = vmatprep.subr.bf16.mxu0 0
    %873 = vmatpush1.bf16.msra.mxu0 %v578
    %874 = vmatprep.subr.bf16.mxu0 0
    %875 = vmatpush1.bf16.msra.mxu0 %v579
    %876 = vmatprep.subr.bf16.mxu0 0
    %877 = vmatpush1.bf16.msra.mxu0 %v580
    %878 = vmatprep.subr.bf16.mxu0 0
    %879 = vmatpush1.bf16.msra.mxu0 %v581
    %880 = vmatprep.subr.bf16.mxu0 0
    %881 = vmatpush1.bf16.msra.mxu0 %v582
    %882 = vmatprep.subr.bf16.mxu0 0
    %883 = vmatpush1.bf16.msra.mxu0 %v583
    %884 = vmatprep.subr.bf16.mxu0 0
    %885 = vmatpush1.bf16.msra.mxu0 %v584
    %886 = vmatprep.subr.bf16.mxu0 0
    %887 = vmatpush1.bf16.msra.mxu0 %v585
    %888 = vmatprep.subr.bf16.mxu0 0
    %889 = vmatpush1.bf16.msra.mxu0 %v586
    %890 = vmatprep.subr.bf16.mxu0 0
    %891 = vmatpush1.bf16.msra.mxu0 %v587
    %892 = vmatprep.subr.bf16.mxu0 0
    %893 = vmatpush1.bf16.msra.mxu0 %v588
    %894 = vmatprep.subr.bf16.mxu0 0
    %895 = vmatpush1.bf16.msra.mxu0 %v589
    %896 = vmatprep.subr.bf16.mxu0 0
    %897 = vmatpush1.bf16.msra.mxu0 %v590
    %898 = vmatprep.mubr.bf16.mxu0 %v183
    %899 = vmatmul.mubr.bf16.gmra.mrb[0].mxu0 %v182
    %v900 = vpop.f32.mrb[0].mxu0
    %v901 = vadd.f32 0.0, %v900
    %v902 = vpop.f32.mrb[0].mxu0
    %v903 = vpop.f32.mrb[0].mxu0
    %v904 = vpop.f32.mrb[0].mxu0
    %905 = vdwg.mxu0
    %906 = vmatprep.subr.bf16.mxu0 0
    %907 = vmatpush1.bf16.msra.mxu0 %v591
    %908 = vmatprep.subr.bf16.mxu0 0
    %909 = vmatpush1.bf16.msra.mxu0 %v592
    %910 = vmatprep.subr.bf16.mxu0 0
    %911 = vmatpush1.bf16.msra.mxu0 %v593
    %912 = vmatprep.subr.bf16.mxu0 0
    %913 = vmatpush1.bf16.msra.mxu0 %v594
    %914 = vmatprep.subr.bf16.mxu0 0
    %915 = vmatpush1.bf16.msra.mxu0 %v595
    %916 = vmatprep.subr.bf16.mxu0 0
    %917 = vmatpush1.bf16.msra.mxu0 %v596
    %918 = vmatprep.subr.bf16.mxu0 0
    %919 = vmatpush1.bf16.msra.mxu0 %v597
    %920 = vmatprep.subr.bf16.mxu0 0
    %921 = vmatpush1.bf16.msra.mxu0 %v598
    %922 = vmatprep.subr.bf16.mxu0 0
    %923 = vmatpush1.bf16.msra.mxu0 %v599
    %924 = vmatprep.subr.bf16.mxu0 0
    %925 = vmatpush1.bf16.msra.mxu0 %v600
    %926 = vmatprep.subr.bf16.mxu0 0
    %927 = vmatpush1.bf16.msra.mxu0 %v601
    %928 = vmatprep.subr.bf16.mxu0 0
    %929 = vmatpush1.bf16.msra.mxu0 %v602
    %930 = vmatprep.subr.bf16.mxu0 0
    %931 = vmatpush1.bf16.msra.mxu0 %v603
    %932 = vmatprep.subr.bf16.mxu0 0
    %933 = vmatpush1.bf16.msra.mxu0 %v604
    %934 = vmatprep.subr.bf16.mxu0 0
    %935 = vmatpush1.bf16.msra.mxu0 %v605
    %936 = vmatprep.subr.bf16.mxu0 0
    %937 = vmatpush1.bf16.msra.mxu0 %v606
    %938 = vmatprep.mubr.bf16.mxu0 %v185
    %939 = vmatmul.mubr.bf16.gmra.mrb[0].mxu0 %v184
    %v940 = vpop.f32.mrb[0].mxu0
    %v941 = vadd.f32 %v901, %v940
    %v942 = vpop.f32.mrb[0].mxu0
    %v943 = vpop.f32.mrb[0].mxu0
    %v944 = vpop.f32.mrb[0].mxu0
    %945 = vdwg.mxu0
    %946 = vmatprep.subr.bf16.mxu0 0
    %947 = vmatpush1.bf16.msra.mxu0 %v607
    %948 = vmatprep.subr.bf16.mxu0 0
    %949 = vmatpush1.bf16.msra.mxu0 %v608
    %950 = vmatprep.subr.bf16.mxu0 0
    %951 = vmatpush1.bf16.msra.mxu0 %v609
    %952 = vmatprep.subr.bf16.mxu0 0
    %953 = vmatpush1.bf16.msra.mxu0 %v610
    %954 = vmatprep.subr.bf16.mxu0 0
    %955 = vmatpush1.bf16.msra.mxu0 %v611
    %956 = vmatprep.subr.bf16.mxu0 0
    %957 = vmatpush1.bf16.msra.mxu0 %v612
    %958 = vmatprep.subr.bf16.mxu0 0
    %959 = vmatpush1.bf16.msra.mxu0 %v613
    %960 = vmatprep.subr.bf16.mxu0 0
    %961 = vmatpush1.bf16.msra.mxu0 %v614
    %962 = vmatprep.subr.bf16.mxu0 0
    %963 = vmatpush1.bf16.msra.mxu0 %v615
    %964 = vmatprep.subr.bf16.mxu0 0
    %965 = vmatpush1.bf16.msra.mxu0 %v616
    %966 = vmatprep.subr.bf16.mxu0 0
    %967 = vmatpush1.bf16.msra.mxu0 %v617
    %968 = vmatprep.subr.bf16.mxu0 0
    %969 = vmatpush1.bf16.msra.mxu0 %v618
    %970 = vmatprep.subr.bf16.mxu0 0
    %971 = vmatpush1.bf16.msra.mxu0 %v619
    %972 = vmatprep.subr.bf16.mxu0 0
    %973 = vmatpush1.bf16.msra.mxu0 %v620
    %974 = vmatprep.subr.bf16.mxu0 0
    %975 = vmatpush1.bf16.msra.mxu0 %v621
    %976 = vmatprep.subr.bf16.mxu0 0
    %977 = vmatpush1.bf16.msra.mxu0 %v622
    %978 = vmatprep.mubr.bf16.mxu0 %v187
    %979 = vmatmul.mubr.bf16.gmra.mrb[0].mxu0 %v186
    %v980 = vpop.f32.mrb[0].mxu0
    %v981 = vadd.f32 %v941, %v980
    %v982 = vpop.f32.mrb[0].mxu0
    %v983 = vpop.f32.mrb[0].mxu0
    %v984 = vpop.f32.mrb[0].mxu0
    %985 = vdwg.mxu0
    %986 = vmatprep.subr.bf16.mxu0 0
    %987 = vmatpush1.bf16.msra.mxu0 %v623
    %988 = vmatprep.subr.bf16.mxu0 0
    %989 = vmatpush1.bf16.msra.mxu0 %v624
    %990 = vmatprep.subr.bf16.mxu0 0
    %991 = vmatpush1.bf16.msra.mxu0 %v625
    %992 = vmatprep.subr.bf16.mxu0 0
    %993 = vmatpush1.bf16.msra.mxu0 %v626
    %994 = vmatprep.subr.bf16.mxu0 0
    %995 = vmatpush1.bf16.msra.mxu0 %v627
    %996 = vmatprep.subr.bf16.mxu0 0
    %997 = vmatpush1.bf16.msra.mxu0 %v628
    %998 = vmatprep.subr.bf16.mxu0 0
    %999 = vmatpush1.bf16.msra.mxu0 %v629
    %1000 = vmatprep.subr.bf16.mxu0 0
    %1001 = vmatpush1.bf16.msra.mxu0 %v630
    %1002 = vmatprep.subr.bf16.mxu0 0
    %1003 = vmatpush1.bf16.msra.mxu0 %v631
    %1004 = vmatprep.subr.bf16.mxu0 0
    %1005 = vmatpush1.bf16.msra.mxu0 %v632
    %1006 = vmatprep.subr.bf16.mxu0 0
    %1007 = vmatpush1.bf16.msra.mxu0 %v633
    %1008 = vmatprep.subr.bf16.mxu0 0
    %1009 = vmatpush1.bf16.msra.mxu0 %v634
    %1010 = vmatprep.subr.bf16.mxu0 0
    %1011 = vmatpush1.bf16.msra.mxu0 %v635
    %1012 = vmatprep.subr.bf16.mxu0 0
    %1013 = vmatpush1.bf16.msra.mxu0 %v636
    %1014 = vmatprep.subr.bf16.mxu0 0
    %1015 = vmatpush1.bf16.msra.mxu0 %v637
    %1016 = vmatprep.subr.bf16.mxu0 0
    %1017 = vmatpush1.bf16.msra.mxu0 %v638
    %1018 = vmatprep.mubr.bf16.mxu0 %v189
    %1019 = vmatmul.mubr.bf16.gmra.mrb[0].mxu0 %v188
    %v1020 = vpop.f32.mrb[0].mxu0
    %v1021 = vadd.f32 %v981, %v1020
    %v1022 = vpop.f32.mrb[0].mxu0
    %v1023 = vpop.f32.mrb[0].mxu0
    %v1024 = vpop.f32.mrb[0].mxu0
    %1025 = vdwg.mxu0
    %v1026 = vadd.f32 %v865, %v1021
    %1027 = vst [vmem:[#allocation2 + $0x8] sm:$0x3] %v1026
    // Predicated region
    $region70: #{simclr_forward.1} parent=1 // pred_check
      %p1028 = pneg %p76
    $region71: #{simclr_forward.1} parent=1 // pred_check_branch
      %1030 = sbr.rel (%p1028) target = $region73
    $region72: #{simclr_forward.1} parent=1 // pred_region
      %v1031 = vlaneseq
      %v1032 = vshrl.u32 %v1031, 7
      %v1033 = vadd.s32 %v1032, 8
      %vm1034 = vcmp.lt.s32.totalorder %v1032, 2
      %vm1035 = vcmp.lt.s32.totalorder %v1033, 2
      %v1036 = vsel %vm1034, 1, 0
      %v1037 = vsel %vm1035, 1, 0
      %v1038 = vcvt.s32.f32 %v1036
      %v1039 = vcvt.s32.f32 %v1037
      %vm1040 = vcmp.ge.s32.totalorder %v1032, 8
      %vm1041 = vcmp.ge.s32.totalorder %v1033, 8
      %vm1042 = vcmp.lt.s32.totalorder %v1032, 10
      %vm1043 = vcmp.lt.s32.totalorder %v1033, 10
      %vm1044 = vmand %vm1040, %vm1042
      %vm1045 = vmand %vm1041, %vm1043
      %v1046 = vsel %vm1044, 1, 0
      %v1047 = vsel %vm1045, 1, 0
      %v1048 = vcvt.s32.f32 %v1046
      %v1049 = vcvt.s32.f32 %v1047
      %v1050 = vld [vmem:[#allocation2] sm:$0xff]
      %v1051 = vld [vmem:[#allocation2 + $0x8] sm:$0xff]
      %v1052 = vld [vmem:[%s3] sm:$0x1]
      %v1054 = vlaneseq
      %v1055 = vshrl.u32 %v1054, 7
      %v1056 = vsub.s32 0, %v1055
      %v1057 = vrot.slane %v1052, %v1056
      %v1059 = vadd.f32 %v1050, %v1057
      %v1060 = vadd.f32 %v1051, %v1057
      %v1061 = vpack.c.bf16 %v1060, %v1059
      %v1062 = vld [vmem:[%s4] sm:$0xf]
      %v1063 = vld [vmem:[%s4 + $0x4] sm:$0xf]
      %v1064 = vld [vmem:[%s4 + $0x8] sm:$0xf]
      %v1065 = vld [vmem:[%s4 + $0xc] sm:$0xf]
      %v1066 = vld [vmem:[%s4 + $0x10] sm:$0xf]
      %v1067 = vld [vmem:[%s4 + $0x14] sm:$0xf]
      %v1068 = vld [vmem:[%s4 + $0x18] sm:$0xf]
      %v1069 = vld [vmem:[%s4 + $0x1c] sm:$0xf]
      %v1070 = vld [vmem:[%s4 + $0x20] sm:$0xf]
      %v1071 = vld [vmem:[%s4 + $0x24] sm:$0xf]
      %v1072 = vld [vmem:[%s4 + $0x28] sm:$0xf]
      %v1073 = vld [vmem:[%s4 + $0x2c] sm:$0xf]
      %v1074 = vld [vmem:[%s4 + $0x30] sm:$0xf]
      %v1075 = vld [vmem:[%s4 + $0x34] sm:$0xf]
      %v1076 = vld [vmem:[%s4 + $0x38] sm:$0xf]
      %v1077 = vld [vmem:[%s4 + $0x3c] sm:$0xf]
      %v1078 = vld [vmem:[%s5] sm:$0x1]
      %v1080 = vlaneseq
      %v1081 = vshrl.u32 %v1080, 7
      %v1082 = vsub.s32 0, %v1081
      %v1083 = vrot.slane %v1078, %v1082
      %v1101 = vunpack.c.l.b16 %v1062
      %v1102 = vunpack.c.l.b16 %v1063
      %v1103 = vunpack.c.l.b16 %v1064
      %v1104 = vunpack.c.l.b16 %v1065
      %v1105 = vunpack.c.l.b16 %v1066
      %v1106 = vunpack.c.l.b16 %v1067
      %v1107 = vunpack.c.l.b16 %v1068
      %v1108 = vunpack.c.l.b16 %v1069
      %v1109 = vunpack.c.l.b16 %v1070
      %v1110 = vunpack.c.l.b16 %v1071
      %v1111 = vunpack.c.l.b16 %v1072
      %v1112 = vunpack.c.l.b16 %v1073
      %v1113 = vunpack.c.l.b16 %v1074
      %v1114 = vunpack.c.l.b16 %v1075
      %v1115 = vunpack.c.l.b16 %v1076
      %v1116 = vunpack.c.l.b16 %v1077
      %v1117 = vpack.c.b16 %v1102, %v1101
      %v1118 = vpack.c.b16 %v1104, %v1103
      %v1119 = vpack.c.b16 %v1106, %v1105
      %v1120 = vpack.c.b16 %v1108, %v1107
      %v1121 = vpack.c.b16 %v1110, %v1109
      %v1122 = vpack.c.b16 %v1112, %v1111
      %v1123 = vpack.c.b16 %v1114, %v1113
      %v1124 = vpack.c.b16 %v1116, %v1115
      %1133 = vmatprep.subr.bf16.mxu0 0
      %1134 = vmatpush1.bf16.msra.mxu0 %v1117
      %1135 = vmatprep.subr.bf16.mxu0 0
      %1136 = vmatpush1.bf16.msra.mxu0 %v1118
      %1137 = vmatprep.subr.bf16.mxu0 0
      %1138 = vmatpush1.bf16.msra.mxu0 %v1119
      %1139 = vmatprep.subr.bf16.mxu0 0
      %1140 = vmatpush1.bf16.msra.mxu0 %v1120
      %1141 = vmatprep.subr.bf16.mxu0 0
      %1142 = vmatpush1.bf16.msra.mxu0 %v1121
      %1143 = vmatprep.subr.bf16.mxu0 0
      %1144 = vmatpush1.bf16.msra.mxu0 %v1122
      %1145 = vmatprep.subr.bf16.mxu0 0
      %1146 = vmatpush1.bf16.msra.mxu0 %v1123
      %1147 = vmatprep.subr.bf16.mxu0 0
      %1148 = vmatpush1.bf16.msra.mxu0 %v1124
      %1149 = vmatprep.subr.bf16.mxu0 0
      %1150 = vmatpush1.bf16.msra.mxu0 0
      %1151 = vmatprep.subr.bf16.mxu0 0
      %1152 = vmatpush1.bf16.msra.mxu0 0
      %1153 = vmatprep.subr.bf16.mxu0 0
      %1154 = vmatpush1.bf16.msra.mxu0 0
      %1155 = vmatprep.subr.bf16.mxu0 0
      %1156 = vmatpush1.bf16.msra.mxu0 0
      %1157 = vmatprep.subr.bf16.mxu0 0
      %1158 = vmatpush1.bf16.msra.mxu0 0
      %1159 = vmatprep.subr.bf16.mxu0 0
      %1160 = vmatpush1.bf16.msra.mxu0 0
      %1161 = vmatprep.subr.bf16.mxu0 0
      %1162 = vmatpush1.bf16.msra.mxu0 0
      %1163 = vmatprep.subr.bf16.mxu0 0
      %1164 = vmatpush1.bf16.msra.mxu0 0
      %1165 = vmatprep.mubr.bf16.mxu0 0
      %1166 = vmatmul.mubr.bf16.gmra.mrb[0].mxu0 %v1061
      %v1167 = vpop.f32.mrb[0].mxu0
      %v1168 = vadd.f32 %v1083, %v1167
      %v1169 = vpop.f32.mrb[0].mxu0
      %v1170 = vpop.f32.mrb[0].mxu0
      %v1171 = vadd.f32 %v1083, %v1170
      %v1172 = vpop.f32.mrb[0].mxu0
      %1173 = vdwg.mxu0
      %v1174 = vld [vmem:[%s6] sm:$0x1]
      %v1175 = vld [vmem:[%s7] sm:$0x1]
      %v1176 = vmul.f32 %v1168, %v1038
      %v1177 = vmul.f32 %v1171, %v1039
      %v1178 = vadd.f32 %v1176, %v1177
      %v1179 = vrot.slane %v1178, 4
      %v1180 = vadd.f32 %v1178, %v1179
      %v1181 = vrot.slane %v1180, 2
      %v1182 = vadd.f32 %v1180, %v1181
      %v1183 = vrot.slane %v1182, 1
      %v1184 = vadd.f32 %v1182, %v1183
      %v1185 = vmul.f32 %v1184, 0.5
      %v1186 = vsub.f32 %v1168, %v1185
      %v1187 = vsub.f32 %v1171, %v1185
      %v1188 = vmul.f32 %v1186, %v1038
      %v1189 = vmul.f32 %v1187, %v1039
      %v1190 = vmul.f32 %v1188, %v1188
      %v1191 = vmul.f32 %v1189, %v1189
      %v1192 = vadd.f32 %v1190, %v1191
      %v1193 = vrot.slane %v1192, 4
      %v1194 = vadd.f32 %v1192, %v1193
      %v1195 = vrot.slane %v1194, 2
      %v1196 = vadd.f32 %v1194, %v1195
      %v1197 = vrot.slane %v1196, 1
      %v1198 = vadd.f32 %v1196, %v1197
      %v1199 = vmul.f32 %v1198, 0.5
      %v1200 = vadd.f32 %v1199, 1e-05
      %v1201 = vrsqrt.pop %v1200
      %v1202 = vmul.f32 %v1174, %v1201
      %v1203 = vmul.f32 %v1185, %v1202
      %v1204 = vsub.f32 %v1175, %v1203
      %v1205 = vmul.f32 %v1168, %v1048
      %v1206 = vmul.f32 %v1171, %v1049
      %v1207 = vadd.f32 %v1205, %v1206
      %v1208 = vrot.slane %v1207, 4
      %v1209 = vadd.f32 %v1207, %v1208
      %v1210 = vrot.slane %v1209, 2
      %v1211 = vadd.f32 %v1209, %v1210
      %v1212 = vrot.slane %v1211, 1
      %v1213 = vadd.f32 %v1211, %v1212
      %v1214 = vmul.f32 %v1213, 0.5
      %v1215 = vsub.f32 %v1168, %v1214
      %v1216 = vsub.f32 %v1171, %v1214
      %v1217 = vmul.f32 %v1215, %v1048
      %v1218 = vmul.f32 %v1216, %v1049
      %v1219 = vmul.f32 %v1217, %v1217
      %v1220 = vmul.f32 %v1218, %v1218
      %v1221 = vadd.f32 %v1219, %v1220
      %v1222 = vrot.slane %v1221, 4
      %v1223 = vadd.f32 %v1221, %v1222
      %v1224 = vrot.slane %v1223, 2
      %v1225 = vadd.f32 %v1223, %v1224
      %v1226 = vrot.slane %v1225, 1
      %v1227 = vadd.f32 %v1225, %v1226
      %v1228 = vmul.f32 %v1227, 0.5
      %v1229 = vadd.f32 %v1228, 1e-05
      %v1230 = vrsqrt.pop %v1229
      %v1231 = vmul.f32 %v1174, %v1230
      %v1232 = vmul.f32 %v1214, %v1231
      %v1233 = vsub.f32 %v1175, %v1232
      %v1235 = vlaneseq
      %v1236 = vshrl.u32 %v1235, 7
      %v1237 = vsub.s32 0, %v1236
      %v1238 = vrot.slane %v1202, %v1237
      %v1240 = vmul.f32 %v1038, %v1238
      %v1241 = vmul.f32 %v1039, %v1238
      %v1243 = vlaneseq
      %v1244 = vshrl.u32 %v1243, 7
      %v1245 = vsub.s32 0, %v1244
      %v1246 = vrot.slane %v1231, %v1245
      %v1248 = vmul.f32 %v1048, %v1246
      %v1249 = vmul.f32 %v1049, %v1246
      %v1250 = vadd.f32 %v1240, %v1248
      %v1251 = vadd.f32 %v1241, %v1249
      %v1253 = vlaneseq
      %v1254 = vshrl.u32 %v1253, 7
      %v1255 = vsub.s32 0, %v1254
      %v1256 = vrot.slane %v1204, %v1255
      %v1258 = vmul.f32 %v1038, %v1256
      %v1259 = vmul.f32 %v1039, %v1256
      %v1261 = vlaneseq
      %v1262 = vshrl.u32 %v1261, 7
      %v1263 = vsub.s32 0, %v1262
      %v1264 = vrot.slane %v1233, %v1263
      %v1266 = vmul.f32 %v1048, %v1264
      %v1267 = vmul.f32 %v1049, %v1264
      %v1268 = vadd.f32 %v1258, %v1266
      %v1269 = vadd.f32 %v1259, %v1267
      %v1270 = vmul.f32 %v1168, %v1250
      %v1271 = vmul.f32 %v1171, %v1251
      %v1272 = vadd.f32 %v1270, %v1268
      %v1273 = vadd.f32 %v1271, %v1269
      %v1274 = vmax.f32 %v1272, 0.0
      %v1275 = vmax.f32 %v1273, 0.0
      %v1276 = vpack.c.bf16 %v1275, %v1274
      %v1277 = vld [vmem:[%s8] sm:$0xf]
      %v1278 = vld [vmem:[%s8 + $0x4] sm:$0xf]
      %v1279 = vld [vmem:[%s8 + $0x8] sm:$0xf]
      %v1280 = vld [vmem:[%s8 + $0xc] sm:$0xf]
      %v1281 = vld [vmem:[%s8 + $0x10] sm:$0xf]
      %v1282 = vld [vmem:[%s8 + $0x14] sm:$0xf]
      %v1283 = vld [vmem:[%s8 + $0x18] sm:$0xf]
      %v1284 = vld [vmem:[%s8 + $0x1c] sm:$0xf]
      %v1285 = vld [vmem:[%s8 + $0x20] sm:$0xf]
      %v1286 = vld [vmem:[%s8 + $0x24] sm:$0xf]
      %v1287 = vld [vmem:[%s8 + $0x28] sm:$0xf]
      %v1288 = vld [vmem:[%s8 + $0x2c] sm:$0xf]
      %v1289 = vld [vmem:[%s8 + $0x30] sm:$0xf]
      %v1290 = vld [vmem:[%s8 + $0x34] sm:$0xf]
      %v1291 = vld [vmem:[%s8 + $0x38] sm:$0xf]
      %v1292 = vld [vmem:[%s8 + $0x3c] sm:$0xf]
      %v1293 = vld [vmem:[%s9] sm:$0x1]
      %v1295 = vlaneseq
      %v1296 = vshrl.u32 %v1295, 7
      %v1297 = vsub.s32 0, %v1296
      %v1298 = vrot.slane %v1293, %v1297
      %v1316 = vunpack.c.l.b16 %v1277
      %v1317 = vunpack.c.l.b16 %v1278
      %v1318 = vunpack.c.l.b16 %v1279
      %v1319 = vunpack.c.l.b16 %v1280
      %v1320 = vunpack.c.l.b16 %v1281
      %v1321 = vunpack.c.l.b16 %v1282
      %v1322 = vunpack.c.l.b16 %v1283
      %v1323 = vunpack.c.l.b16 %v1284
      %v1324 = vunpack.c.l.b16 %v1285
      %v1325 = vunpack.c.l.b16 %v1286
      %v1326 = vunpack.c.l.b16 %v1287
      %v1327 = vunpack.c.l.b16 %v1288
      %v1328 = vunpack.c.l.b16 %v1289
      %v1329 = vunpack.c.l.b16 %v1290
      %v1330 = vunpack.c.l.b16 %v1291
      %v1331 = vunpack.c.l.b16 %v1292
      %v1332 = vpack.c.b16 %v1317, %v1316
      %v1333 = vpack.c.b16 %v1319, %v1318
      %v1334 = vpack.c.b16 %v1321, %v1320
      %v1335 = vpack.c.b16 %v1323, %v1322
      %v1336 = vpack.c.b16 %v1325, %v1324
      %v1337 = vpack.c.b16 %v1327, %v1326
      %v1338 = vpack.c.b16 %v1329, %v1328
      %v1339 = vpack.c.b16 %v1331, %v1330
      %1348 = vmatprep.subr.bf16.mxu0 0
      %1349 = vmatpush1.bf16.msra.mxu0 %v1332
      %1350 = vmatprep.subr.bf16.mxu0 0
      %1351 = vmatpush1.bf16.msra.mxu0 %v1333
      %1352 = vmatprep.subr.bf16.mxu0 0
      %1353 = vmatpush1.bf16.msra.mxu0 %v1334
      %1354 = vmatprep.subr.bf16.mxu0 0
      %1355 = vmatpush1.bf16.msra.mxu0 %v1335
      %1356 = vmatprep.subr.bf16.mxu0 0
      %1357 = vmatpush1.bf16.msra.mxu0 %v1336
      %1358 = vmatprep.subr.bf16.mxu0 0
      %1359 = vmatpush1.bf16.msra.mxu0 %v1337
      %1360 = vmatprep.subr.bf16.mxu0 0
      %1361 = vmatpush1.bf16.msra.mxu0 %v1338
      %1362 = vmatprep.subr.bf16.mxu0 0
      %1363 = vmatpush1.bf16.msra.mxu0 %v1339
      %1364 = vmatprep.subr.bf16.mxu0 0
      %1365 = vmatpush1.bf16.msra.mxu0 0
      %1366 = vmatprep.subr.bf16.mxu0 0
      %1367 = vmatpush1.bf16.msra.mxu0 0
      %1368 = vmatprep.subr.bf16.mxu0 0
      %1369 = vmatpush1.bf16.msra.mxu0 0
      %1370 = vmatprep.subr.bf16.mxu0 0
      %1371 = vmatpush1.bf16.msra.mxu0 0
      %1372 = vmatprep.subr.bf16.mxu0 0
      %1373 = vmatpush1.bf16.msra.mxu0 0
      %1374 = vmatprep.subr.bf16.mxu0 0
      %1375 = vmatpush1.bf16.msra.mxu0 0
      %1376 = vmatprep.subr.bf16.mxu0 0
      %1377 = vmatpush1.bf16.msra.mxu0 0
      %1378 = vmatprep.subr.bf16.mxu0 0
      %1379 = vmatpush1.bf16.msra.mxu0 0
      %1380 = vmatprep.mubr.bf16.mxu0 0
      %1381 = vmatmul.mubr.bf16.gmra.mrb[0].mxu0 %v1276
      %v1382 = vpop.f32.mrb[0].mxu0
      %v1383 = vadd.f32 %v1298, %v1382
      %v1384 = vpop.f32.mrb[0].mxu0
      %v1385 = vpop.f32.mrb[0].mxu0
      %v1386 = vadd.f32 %v1298, %v1385
      %v1387 = vpop.f32.mrb[0].mxu0
      %1388 = vdwg.mxu0
      %v1389 = vld [vmem:[%s10] sm:$0x1]
      %v1390 = vld [vmem:[%s11] sm:$0x1]
      %v1391 = vmul.f32 %v1383, %v1038
      %v1392 = vmul.f32 %v1386, %v1039
      %v1393 = vadd.f32 %v1391, %v1392
      %v1394 = vrot.slane %v1393, 4
      %v1395 = vadd.f32 %v1393, %v1394
      %v1396 = vrot.slane %v1395, 2
      %v1397 = vadd.f32 %v1395, %v1396
      %v1398 = vrot.slane %v1397, 1
      %v1399 = vadd.f32 %v1397, %v1398
      %v1400 = vmul.f32 %v1399, 0.5
      %v1401 = vsub.f32 %v1383, %v1400
      %v1402 = vsub.f32 %v1386, %v1400
      %v1403 = vmul.f32 %v1401, %v1038
      %v1404 = vmul.f32 %v1402, %v1039
      %v1405 = vmul.f32 %v1403, %v1403
      %v1406 = vmul.f32 %v1404, %v1404
      %v1407 = vadd.f32 %v1405, %v1406
      %v1408 = vrot.slane %v1407, 4
      %v1409 = vadd.f32 %v1407, %v1408
      %v1410 = vrot.slane %v1409, 2
      %v1411 = vadd.f32 %v1409, %v1410
      %v1412 = vrot.slane %v1411, 1
      %v1413 = vadd.f32 %v1411, %v1412
      %v1414 = vmul.f32 %v1413, 0.5
      %v1415 = vadd.f32 %v1414, 1e-05
      %v1416 = vrsqrt.pop %v1415
      %v1417 = vmul.f32 %v1389, %v1416
      %v1418 = vmul.f32 %v1400, %v1417
      %v1419 = vsub.f32 %v1390, %v1418
      %v1420 = vmul.f32 %v1383, %v1048
      %v1421 = vmul.f32 %v1386, %v1049
      %v1422 = vadd.f32 %v1420, %v1421
      %v1423 = vrot.slane %v1422, 4
      %v1424 = vadd.f32 %v1422, %v1423
      %v1425 = vrot.slane %v1424, 2
      %v1426 = vadd.f32 %v1424, %v1425
      %v1427 = vrot.slane %v1426, 1
      %v1428 = vadd.f32 %v1426, %v1427
      %v1429 = vmul.f32 %v1428, 0.5
      %v1430 = vsub.f32 %v1383, %v1429
      %v1431 = vsub.f32 %v1386, %v1429
      %v1432 = vmul.f32 %v1430, %v1048
      %v1433 = vmul.f32 %v1431, %v1049
      %v1434 = vmul.f32 %v1432, %v1432
      %v1435 = vmul.f32 %v1433, %v1433
      %v1436 = vadd.f32 %v1434, %v1435
      %v1437 = vrot.slane %v1436, 4
      %v1438 = vadd.f32 %v1436, %v1437
      %v1439 = vrot.slane %v1438, 2
      %v1440 = vadd.f32 %v1438, %v1439
      %v1441 = vrot.slane %v1440, 1
      %v1442 = vadd.f32 %v1440, %v1441
      %v1443 = vmul.f32 %v1442, 0.5
      %v1444 = vadd.f32 %v1443, 1e-05
      %v1445 = vrsqrt.pop %v1444
      %v1446 = vmul.f32 %v1389, %v1445
      %v1447 = vmul.f32 %v1429, %v1446
      %v1448 = vsub.f32 %v1390, %v1447
      %v1450 = vlaneseq
      %v1451 = vshrl.u32 %v1450, 7
      %v1452 = vsub.s32 0, %v1451
      %v1453 = vrot.slane %v1417, %v1452
      %v1455 = vmul.f32 %v1038, %v1453
      %v1456 = vmul.f32 %v1039, %v1453
      %v1458 = vlaneseq
      %v1459 = vshrl.u32 %v1458, 7
      %v1460 = vsub.s32 0, %v1459
      %v1461 = vrot.slane %v1446, %v1460
      %v1463 = vmul.f32 %v1048, %v1461
      %v1464 = vmul.f32 %v1049, %v1461
      %v1465 = vadd.f32 %v1455, %v1463
      %v1466 = vadd.f32 %v1456, %v1464
      %v1468 = vlaneseq
      %v1469 = vshrl.u32 %v1468, 7
      %v1470 = vsub.s32 0, %v1469
      %v1471 = vrot.slane %v1419, %v1470
      %v1473 = vmul.f32 %v1038, %v1471
      %v1474 = vmul.f32 %v1039, %v1471
      %v1476 = vlaneseq
      %v1477 = vshrl.u32 %v1476, 7
      %v1478 = vsub.s32 0, %v1477
      %v1479 = vrot.slane %v1448, %v1478
      %v1481 = vmul.f32 %v1048, %v1479
      %v1482 = vmul.f32 %v1049, %v1479
      %v1483 = vadd.f32 %v1473, %v1481
      %v1484 = vadd.f32 %v1474, %v1482
      %v1485 = vmul.f32 %v1383, %v1465
      %v1486 = vmul.f32 %v1386, %v1466
      %v1487 = vadd.f32 %v1485, %v1483
      %v1488 = vadd.f32 %v1486, %v1484
      %v1489 = vmax.f32 %v1487, 0.0
      %v1490 = vmax.f32 %v1488, 0.0
      %v1491 = vpack.c.bf16 %v1490, %v1489
      %v1492 = vld [vmem:[#allocation5] sm:$0xf]
      %v1493 = vld [vmem:[#allocation5 + $0x4] sm:$0xf]
      %v1494 = vld [vmem:[#allocation5 + $0x8] sm:$0xf]
      %v1495 = vld [vmem:[#allocation5 + $0xc] sm:$0xf]
      %v1496 = vld [vmem:[#allocation5 + $0x10] sm:$0xf]
      %v1497 = vld [vmem:[#allocation5 + $0x14] sm:$0xf]
      %v1498 = vld [vmem:[#allocation5 + $0x18] sm:$0xf]
      %v1499 = vld [vmem:[#allocation5 + $0x1c] sm:$0xf]
      %v1500 = vld [vmem:[#allocation5 + $0x20] sm:$0xf]
      %v1501 = vld [vmem:[#allocation5 + $0x24] sm:$0xf]
      %v1502 = vld [vmem:[#allocation5 + $0x28] sm:$0xf]
      %v1503 = vld [vmem:[#allocation5 + $0x2c] sm:$0xf]
      %v1504 = vld [vmem:[#allocation5 + $0x30] sm:$0xf]
      %v1505 = vld [vmem:[#allocation5 + $0x34] sm:$0xf]
      %v1506 = vld [vmem:[#allocation5 + $0x38] sm:$0xf]
      %v1507 = vld [vmem:[#allocation5 + $0x3c] sm:$0xf]
      %v1508 = vld [vmem:[%s13] sm:$0x1]
      %v1510 = vlaneseq
      %v1511 = vshrl.u32 %v1510, 7
      %v1512 = vsub.s32 0, %v1511
      %v1513 = vrot.slane %v1508, %v1512
      %v1531 = vunpack.c.l.b16 %v1492
      %v1532 = vunpack.c.l.b16 %v1493
      %v1533 = vunpack.c.l.b16 %v1494
      %v1534 = vunpack.c.l.b16 %v1495
      %v1535 = vunpack.c.l.b16 %v1496
      %v1536 = vunpack.c.l.b16 %v1497
      %v1537 = vunpack.c.l.b16 %v1498
      %v1538 = vunpack.c.l.b16 %v1499
      %v1539 = vunpack.c.l.b16 %v1500
      %v1540 = vunpack.c.l.b16 %v1501
      %v1541 = vunpack.c.l.b16 %v1502
      %v1542 = vunpack.c.l.b16 %v1503
      %v1543 = vunpack.c.l.b16 %v1504
      %v1544 = vunpack.c.l.b16 %v1505
      %v1545 = vunpack.c.l.b16 %v1506
      %v1546 = vunpack.c.l.b16 %v1507
      %v1547 = vpack.c.b16 %v1532, %v1531
      %v1548 = vpack.c.b16 %v1534, %v1533
      %v1549 = vpack.c.b16 %v1536, %v1535
      %v1550 = vpack.c.b16 %v1538, %v1537
      %v1551 = vpack.c.b16 %v1540, %v1539
      %v1552 = vpack.c.b16 %v1542, %v1541
      %v1553 = vpack.c.b16 %v1544, %v1543
      %v1554 = vpack.c.b16 %v1546, %v1545
      %1563 = vmatprep.subr.bf16.mxu0 0
      %1564 = vmatpush1.bf16.msra.mxu0 %v1547
      %1565 = vmatprep.subr.bf16.mxu0 0
      %1566 = vmatpush1.bf16.msra.mxu0 %v1548
      %1567 = vmatprep.subr.bf16.mxu0 0
      %1568 = vmatpush1.bf16.msra.mxu0 %v1549
      %1569 = vmatprep.subr.bf16.mxu0 0
      %1570 = vmatpush1.bf16.msra.mxu0 %v1550
      %1571 = vmatprep.subr.bf16.mxu0 0
      %1572 = vmatpush1.bf16.msra.mxu0 %v1551
      %1573 = vmatprep.subr.bf16.mxu0 0
      %1574 = vmatpush1.bf16.msra.mxu0 %v1552
      %1575 = vmatprep.subr.bf16.mxu0 0
      %1576 = vmatpush1.bf16.msra.mxu0 %v1553
      %1577 = vmatprep.subr.bf16.mxu0 0
      %1578 = vmatpush1.bf16.msra.mxu0 %v1554
      %1579 = vmatprep.subr.bf16.mxu0 0
      %1580 = vmatpush1.bf16.msra.mxu0 0
      %1581 = vmatprep.subr.bf16.mxu0 0
      %1582 = vmatpush1.bf16.msra.mxu0 0
      %1583 = vmatprep.subr.bf16.mxu0 0
      %1584 = vmatpush1.bf16.msra.mxu0 0
      %1585 = vmatprep.subr.bf16.mxu0 0
      %1586 = vmatpush1.bf16.msra.mxu0 0
      %1587 = vmatprep.subr.bf16.mxu0 0
      %1588 = vmatpush1.bf16.msra.mxu0 0
      %1589 = vmatprep.subr.bf16.mxu0 0
      %1590 = vmatpush1.bf16.msra.mxu0 0
      %1591 = vmatprep.subr.bf16.mxu0 0
      %1592 = vmatpush1.bf16.msra.mxu0 0
      %1593 = vmatprep.subr.bf16.mxu0 0
      %1594 = vmatpush1.bf16.msra.mxu0 0
      %1595 = vmatprep.mubr.bf16.mxu0 0
      %1596 = vmatmul.mubr.bf16.gmra.mrb[0].mxu0 %v1491
      %v1597 = vpop.f32.mrb[0].mxu0
      %v1598 = vadd.f32 %v1513, %v1597
      %v1599 = vpop.f32.mrb[0].mxu0
      %v1600 = vpop.f32.mrb[0].mxu0
      %v1601 = vadd.f32 %v1513, %v1600
      %v1602 = vpop.f32.mrb[0].mxu0
      %1603 = vdwg.mxu0
      %1604 = vst [vmem:[%s14] sm:$0xff] %v1598
      %1605 = vst [vmem:[%s14 + $0x8] sm:$0xff] %v1601
    $region73: #{simclr_forward.1} parent=1 // pred_fallthru
      _
    // Predicated region
    $region74: #{simclr_forward.1} parent=1 // pred_check
      _
    $region75: #{simclr_forward.1} parent=1 // pred_check_branch
      %1607 = sbr.rel (0) target = $region77
    $region76: #{simclr_forward.1} parent=1 // pred_region
      _
    $region77: #{simclr_forward.1} parent=1 // pred_fallthru
      _
    // Predicated region
    $region78: #{simclr_forward.1} parent=1 // pred_check
      _
    $region79: #{simclr_forward.1} parent=1 // pred_check_branch
      %1609 = sbr.rel (0) target = $region81
    $region80: #{simclr_forward.1} parent=1 // pred_region
      _
    $region81: #{simclr_forward.1} parent=1 // pred_fallthru
      _
    %1610 = vsyncpa [#allocation4], 1
    %1611 = vsyncpa [#allocation6], 1

</llo_original>
